<compile_context>
chip_gen: v7x
topology: tpu7x:2x2x1
jax: 0.10.0
libtpu: 0.0.40
codegen_flags: <defaults>
</compile_context>

<pallas_src>
import jax
import jax.numpy as jnp
from jax import lax
from jax.experimental import pallas as pl
from jax.experimental.pallas import tpu as pltpu

FOUR_PI = 4.0 * 3.1415926536


def mvmf_kernel(x_ref, coord_ref, w_ref, b_ref, coeff_ref, mu_kt_ref,
                mvmf_ref, vmfw_ref):
    # fc1: (TB, F) @ (F, D) on the MXU. Weight is pre-transposed once in the
    # wrapper, so the resident block needs no per-step relayout.
    logits = jnp.dot(x_ref[...], w_ref[...],
                     preferred_element_type=jnp.float32,
                     precision=lax.Precision.HIGHEST) + b_ref[...]

    # Exact, numerically stable softmax over the distribution axis.
    m = jnp.max(logits, axis=1, keepdims=True)
    e = jnp.exp(logits - m)
    vmf_w = e / jnp.sum(e, axis=1, keepdims=True)          # (TB, D)

    # kappa * d = coord @ (kappa * mu)^T with K=3: three VPU rank-1 FMAs
    # instead of a padded MXU contraction.
    coord = coord_ref[...]                                  # (TB, 3)
    mu_kt = mu_kt_ref[...]                                  # (3, D), kappa-scaled
    kd = (coord[:, 0:1] * mu_kt[0:1, :]
          + coord[:, 1:2] * mu_kt[1:2, :]
          + coord[:, 2:3] * mu_kt[2:3, :])                  # (TB, D)

    # vmf = (kappa / sinh(kappa) / 4pi) * exp(kappa * d)
    vmf = coeff_ref[...] * jnp.exp(kd)                      # (TB, D)

    vmfw_ref[...] = vmf_w
    mvmf_ref[...] = jnp.sum(vmf_w * vmf, axis=1, keepdims=True)


def _derive_tb(B, F, D, vmem_budget_bytes=40 << 20):
    """Batch tile from a VMEM budget (v7x-safe 64 MiB ceiling with headroom).

    Streamed rows (x: F, coord: 3, vmf_w: D, mvmf: 1) are double-buffered;
    resident params (w (F,D), bias, coeff, mu_kappa^T) are single-buffered.
    """
    per_row = 2 * 4 * (F + 3 + D + 1)
    resident = 4 * (F * D + 5 * D)
    avail = max(vmem_budget_bytes - resident, 8 * per_row)
    tb = int((avail // per_row // 8) * 8)
    tb = max(8, min(tb, 1024))

    b_pad = -(-B // 8) * 8
    tb = min(tb, b_pad)
    if b_pad >= 16:
        # Keep at least 2 grid blocks so both v7x TensorCores get work.
        half = -(-((B + 1) // 2) // 8) * 8
        tb = min(tb, half)
    return tb


def _resident_spec(shape, single_buffer):
    index_map = lambda i: (0,) * len(shape)
    if single_buffer:
        # Constant-index blocks are fetched once; single-buffer them to halve
        # their VMEM footprint (frees room for a larger batch tile).
        return pl.BlockSpec(shape, index_map, pipeline_mode=pl.Buffered(1))
    return pl.BlockSpec(shape, index_map)


def mvmf_forward(weights, euclidean_coord, fc1_w, fc1_b, kappa, mu, *, tb=None):
    """weights: (B, F), euclidean_coord: (B, 3),
    fc1_w: (D, F) (PyTorch layout), fc1_b: (D,), kappa: (D,), mu: (D, 3).
    Returns (mvmf (B,), vmf_weights (B, D))."""
    B, F = weights.shape
    D = fc1_w.shape[0]

    if tb is None:
        tb = _derive_tb(B, F, D)
    tb = int(max(8, (tb // 8) * 8))

    n_blocks = -(-B // tb)
    Bp = n_blocks * tb
    if Bp != B:
        pad = Bp - B
        weights = jnp.pad(weights, ((0, pad), (0, 0)))
        euclidean_coord = jnp.pad(euclidean_coord, ((0, pad), (0, 0)))

    x = weights.astype(jnp.float32)
    coord = euclidean_coord.astype(jnp.float32)
    kappa_f = kappa.astype(jnp.float32)

    w_t = fc1_w.astype(jnp.float32).T                       # (F, D): one-time transpose
    b_2d = fc1_b.astype(jnp.float32).reshape(1, D)
    # Batch-independent coefficient (same overflow behaviour as the reference
    # for very large kappa, so semantics are preserved).
    coeff_2d = (kappa_f / jnp.sinh(kappa_f) / FOUR_PI).reshape(1, D)
    mu_kt = (mu.astype(jnp.float32) * kappa_f[:, None]).T   # (3, D), kappa folded in

    streamed_specs = [
        pl.BlockSpec((tb, F), lambda i: (i, 0)),            # activations
        pl.BlockSpec((tb, 3), lambda i: (i, 0)),            # coords
    ]
    out_specs = (
        pl.BlockSpec((tb, 1), lambda i: (i, 0)),            # mvmf
        pl.BlockSpec((tb, D), lambda i: (i, 0)),            # vmf weights (lane-dense)
    )
    compiler_params = pltpu.CompilerParams(
        dimension_semantics=("parallel",),
        vmem_limit_bytes=48 * 1024 * 1024,
    )

    def run(single_buffer_params):
        return pl.pallas_call(
            mvmf_kernel,
            out_shape=(
                jax.ShapeDtypeStruct((Bp, 1), jnp.float32),
                jax.ShapeDtypeStruct((Bp, D), jnp.float32),
            ),
            grid=(n_blocks,),
            in_specs=streamed_specs + [
                _resident_spec((F, D), single_buffer_params),   # fc1 weight^T
                _resident_spec((1, D), single_buffer_params),   # bias
                _resident_spec((1, D), single_buffer_params),   # coeff
                _resident_spec((3, D), single_buffer_params),   # kappa*mu^T
            ],
            out_specs=out_specs,
            compiler_params=compiler_params,
        )(x, coord, w_t, b_2d, coeff_2d, mu_kt)

    try:
        mvmf, vmf_w = run(True)
    except Exception:
        # Fallback for jax versions without pipeline_mode=pl.Buffered support.
        mvmf, vmf_w = run(False)

    return mvmf[:B, 0], vmf_w[:B]


def reference(weights, euclidean_coord, fc1_w, fc1_b, kappa, mu):
    hi = lax.Precision.HIGHEST
    logits = jnp.dot(weights, fc1_w.T, precision=hi) + fc1_b
    vmf_w = jax.nn.softmax(logits, axis=1)
    d = jnp.dot(euclidean_coord, mu.T, precision=hi)
    vmf = (kappa / jnp.sinh(kappa) / FOUR_PI) * jnp.exp(kappa * d)
    mvmf = jnp.sum(vmf_w * vmf, axis=1)
    return mvmf, vmf_w


if __name__ == "__main__":
    B, F, D = 16, 32, 128        # small shapes; derived tb=8 -> 2 grid steps
    key = jax.random.PRNGKey(0)
    k1, k2, k3, k4, k5, k6 = jax.random.split(key, 6)

    # deterministic synthetic parameters
    fc1_w = jax.random.normal(k1, (D, F), jnp.float32) * 0.1
    fc1_b = jax.random.normal(k2, (D,), jnp.float32) * 0.1
    kappa = jax.random.uniform(k3, (D,), jnp.float32, minval=0.5, maxval=2.0)
    mu = jax.random.normal(k4, (D, 3), jnp.float32)
    mu = mu / jnp.linalg.norm(mu, axis=1, keepdims=True)

    # deterministic inputs
    x = jax.random.normal(k5, (B, F), jnp.float32)
    coord = jax.random.normal(k6, (B, 3), jnp.float32)
    coord = coord / jnp.linalg.norm(coord, axis=1, keepdims=True)

    mvmf, vmf_w = mvmf_forward(x, coord, fc1_w, fc1_b, kappa, mu)
    jax.block_until_ready((mvmf, vmf_w))

    mvmf_ref, vmf_w_ref = reference(x, coord, fc1_w, fc1_b, kappa, mu)
    assert mvmf.shape == (B,) and vmf_w.shape == (B, D)
    assert bool(jnp.allclose(mvmf, mvmf_ref, atol=1e-5, rtol=1e-3)), (
        float(jnp.max(jnp.abs(mvmf - mvmf_ref))))
    assert bool(jnp.allclose(vmf_w, vmf_w_ref, atol=1e-5, rtol=1e-3)), (
        float(jnp.max(jnp.abs(vmf_w - vmf_w_ref))))

    print("KERNEL_OK")
</pallas_src>

<mosaic_0001>
module attributes {stable_mosaic.version = 11 : i64} {
  func.func @mvmf_kernel(%arg0: i32, %arg1: memref<8x32xf32, #tpu.memory_space<vmem>>, %arg2: memref<8x3xf32, #tpu.memory_space<vmem>>, %arg3: memref<32x128xf32, #tpu.memory_space<vmem>>, %arg4: memref<1x128xf32, #tpu.memory_space<vmem>>, %arg5: memref<1x128xf32, #tpu.memory_space<vmem>>, %arg6: memref<3x128xf32, #tpu.memory_space<vmem>>, %arg7: memref<8x1xf32, #tpu.memory_space<vmem>>, %arg8: memref<8x128xf32, #tpu.memory_space<vmem>>) attributes {dimension_semantics = [#tpu.dimension_semantics<parallel>], iteration_bounds = array<i64: 2>, scalar_prefetch = 0 : i64, scratch_operands = 0 : i64, tpu.core_type = #tpu.core_type<tc>, window_params = [{transform_indices = @transform_0, window_bounds = array<i64: 8, 32>}, {transform_indices = @transform_1, window_bounds = array<i64: 8, 3>}, {pipeline_mode = #tpu.pipeline_mode<synchronous>, transform_indices = @transform_2, window_bounds = array<i64: 32, 128>}, {pipeline_mode = #tpu.pipeline_mode<synchronous>, transform_indices = @transform_3, window_bounds = array<i64: 1, 128>}, {pipeline_mode = #tpu.pipeline_mode<synchronous>, transform_indices = @transform_4, window_bounds = array<i64: 1, 128>}, {pipeline_mode = #tpu.pipeline_mode<synchronous>, transform_indices = @transform_5, window_bounds = array<i64: 3, 128>}, {transform_indices = @transform_6, window_bounds = array<i64: 8, 1>}, {transform_indices = @transform_7, window_bounds = array<i64: 8, 128>}]} {
    %c0 = arith.constant 0 : index
    %c0_0 = arith.constant 0 : index
    %0 = vector.load %arg1[%c0, %c0_0] : memref<8x32xf32, #tpu.memory_space<vmem>>, vector<8x32xf32>
    %c0_1 = arith.constant 0 : index
    %c0_2 = arith.constant 0 : index
    %1 = vector.load %arg3[%c0_1, %c0_2] : memref<32x128xf32, #tpu.memory_space<vmem>>, vector<32x128xf32>
    %cst = arith.constant dense<0.000000e+00> : vector<8x128xf32>
    %2 = tpu.matmul %0, %1, %cst {dimension_numbers = #tpu.dot_dimension_numbers<[1], [0], [0], [1], [0, 0, 1, 1], [], []>, precision = #tpu.contract_precision<fp32>} : vector<8x32xf32>, vector<32x128xf32>, vector<8x128xf32> -> vector<8x128xf32>
    %c0_3 = arith.constant 0 : index
    %c0_4 = arith.constant 0 : index
    %3 = vector.load %arg4[%c0_3, %c0_4] : memref<1x128xf32, #tpu.memory_space<vmem>>, vector<1x128xf32>
    %4 = vector.broadcast %3 : vector<1x128xf32> to vector<8x128xf32>
    %5 = arith.addf %2, %4 : vector<8x128xf32>
    %cst_5 = arith.constant dense<0xFF800000> : vector<8xf32>
    %6 = vector.multi_reduction <maximumf>, %5, %cst_5 [1] : vector<8x128xf32> to vector<8xf32>
    %7 = vector.shape_cast %6 : vector<8xf32> to vector<8x1xf32>
    %8 = vector.broadcast %7 : vector<8x1xf32> to vector<8x128xf32>
    %9 = arith.subf %5, %8 : vector<8x128xf32>
    %10 = math.exp %9 : vector<8x128xf32>
    %cst_6 = arith.constant dense<0.000000e+00> : vector<8xf32>
    %11 = vector.multi_reduction <add>, %10, %cst_6 [1] : vector<8x128xf32> to vector<8xf32>
    %12 = vector.shape_cast %11 : vector<8xf32> to vector<8x1xf32>
    %13 = vector.broadcast %12 : vector<8x1xf32> to vector<8x128xf32>
    %14 = arith.divf %10, %13 : vector<8x128xf32>
    %c0_7 = arith.constant 0 : index
    %c0_8 = arith.constant 0 : index
    %15 = vector.load %arg2[%c0_7, %c0_8] : memref<8x3xf32, #tpu.memory_space<vmem>>, vector<8x3xf32>
    %c0_9 = arith.constant 0 : index
    %c0_10 = arith.constant 0 : index
    %16 = vector.load %arg6[%c0_9, %c0_10] : memref<3x128xf32, #tpu.memory_space<vmem>>, vector<3x128xf32>
    %17 = vector.extract_strided_slice %15 {offsets = [0, 0], sizes = [8, 1], strides = [1, 1]} : vector<8x3xf32> to vector<8x1xf32>
    %18 = vector.extract_strided_slice %16 {offsets = [0, 0], sizes = [1, 128], strides = [1, 1]} : vector<3x128xf32> to vector<1x128xf32>
    %19 = vector.broadcast %17 : vector<8x1xf32> to vector<8x128xf32>
    %20 = vector.broadcast %18 : vector<1x128xf32> to vector<8x128xf32>
    %21 = arith.mulf %19, %20 : vector<8x128xf32>
    %22 = vector.extract_strided_slice %15 {offsets = [0, 1], sizes = [8, 1], strides = [1, 1]} : vector<8x3xf32> to vector<8x1xf32>
    %23 = vector.extract_strided_slice %16 {offsets = [1, 0], sizes = [1, 128], strides = [1, 1]} : vector<3x128xf32> to vector<1x128xf32>
    %24 = vector.broadcast %22 : vector<8x1xf32> to vector<8x128xf32>
    %25 = vector.broadcast %23 : vector<1x128xf32> to vector<8x128xf32>
    %26 = arith.mulf %24, %25 : vector<8x128xf32>
    %27 = arith.addf %21, %26 : vector<8x128xf32>
    %28 = vector.extract_strided_slice %15 {offsets = [0, 2], sizes = [8, 1], strides = [1, 1]} : vector<8x3xf32> to vector<8x1xf32>
    %29 = vector.extract_strided_slice %16 {offsets = [2, 0], sizes = [1, 128], strides = [1, 1]} : vector<3x128xf32> to vector<1x128xf32>
    %30 = vector.broadcast %28 : vector<8x1xf32> to vector<8x128xf32>
    %31 = vector.broadcast %29 : vector<1x128xf32> to vector<8x128xf32>
    %32 = arith.mulf %30, %31 : vector<8x128xf32>
    %33 = arith.addf %27, %32 : vector<8x128xf32>
    %c0_11 = arith.constant 0 : index
    %c0_12 = arith.constant 0 : index
    %34 = vector.load %arg5[%c0_11, %c0_12] : memref<1x128xf32, #tpu.memory_space<vmem>>, vector<1x128xf32>
    %35 = math.exp %33 : vector<8x128xf32>
    %36 = vector.broadcast %34 : vector<1x128xf32> to vector<8x128xf32>
    %37 = arith.mulf %36, %35 : vector<8x128xf32>
    %c0_13 = arith.constant 0 : index
    %c0_14 = arith.constant 0 : index
    %38 = vector.load %arg8[%c0_13, %c0_14] : memref<8x128xf32, #tpu.memory_space<vmem>>, vector<8x128xf32>
    tpu.vector_store %arg8[%c0_13, %c0_14], %14 {strides = array<i32>} : memref<8x128xf32, #tpu.memory_space<vmem>>, vector<8x128xf32>,
    %39 = arith.mulf %14, %37 : vector<8x128xf32>
    %cst_15 = arith.constant dense<0.000000e+00> : vector<8xf32>
    %40 = vector.multi_reduction <add>, %39, %cst_15 [1] : vector<8x128xf32> to vector<8xf32>
    %41 = vector.shape_cast %40 : vector<8xf32> to vector<8x1xf32>
    %c0_16 = arith.constant 0 : index
    %c0_17 = arith.constant 0 : index
    %42 = vector.load %arg7[%c0_16, %c0_17] : memref<8x1xf32, #tpu.memory_space<vmem>>, vector<8x1xf32>
    tpu.vector_store %arg7[%c0_16, %c0_17], %41 {strides = array<i32>} : memref<8x1xf32, #tpu.memory_space<vmem>>, vector<8x1xf32>,
    return
  }
  func.func @transform_0(%arg0: i32) -> (i32, i32) {
    %c0_i32 = arith.constant 0 : i32
    %c0_i32_0 = arith.constant 0 : i32
    return %arg0, %c0_i32 : i32, i32
  }
  func.func @transform_1(%arg0: i32) -> (i32, i32) {
    %c0_i32 = arith.constant 0 : i32
    %c0_i32_0 = arith.constant 0 : i32
    return %arg0, %c0_i32 : i32, i32
  }
  func.func @transform_2(%arg0: i32) -> (i32, i32) {
    %c0_i32 = arith.constant 0 : i32
    %c0_i32_0 = arith.constant 0 : i32
    %c0_i32_1 = arith.constant 0 : i32
    return %c0_i32, %c0_i32_0 : i32, i32
  }
  func.func @transform_3(%arg0: i32) -> (i32, i32) {
    %c0_i32 = arith.constant 0 : i32
    %c0_i32_0 = arith.constant 0 : i32
    %c0_i32_1 = arith.constant 0 : i32
    return %c0_i32, %c0_i32_0 : i32, i32
  }
  func.func @transform_4(%arg0: i32) -> (i32, i32) {
    %c0_i32 = arith.constant 0 : i32
    %c0_i32_0 = arith.constant 0 : i32
    %c0_i32_1 = arith.constant 0 : i32
    return %c0_i32, %c0_i32_0 : i32, i32
  }
  func.func @transform_5(%arg0: i32) -> (i32, i32) {
    %c0_i32 = arith.constant 0 : i32
    %c0_i32_0 = arith.constant 0 : i32
    %c0_i32_1 = arith.constant 0 : i32
    return %c0_i32, %c0_i32_0 : i32, i32
  }
  func.func @transform_6(%arg0: i32) -> (i32, i32) {
    %c0_i32 = arith.constant 0 : i32
    %c0_i32_0 = arith.constant 0 : i32
    return %arg0, %c0_i32 : i32, i32
  }
  func.func @transform_7(%arg0: i32) -> (i32, i32) {
    %c0_i32 = arith.constant 0 : i32
    %c0_i32_0 = arith.constant 0 : i32
    return %arg0, %c0_i32 : i32, i32
  }
}

module attributes {stable_mosaic.version = 11 : i64} {
  func.func @mvmf_kernel(%arg0: i32, %arg1: memref<8x32xf32, #tpu.memory_space<vmem>>, %arg2: memref<8x3xf32, #tpu.memory_space<vmem>>, %arg3: memref<32x128xf32, #tpu.memory_space<vmem>>, %arg4: memref<1x128xf32, #tpu.memory_space<vmem>>, %arg5: memref<1x128xf32, #tpu.memory_space<vmem>>, %arg6: memref<3x128xf32, #tpu.memory_space<vmem>>, %arg7: memref<8x1xf32, #tpu.memory_space<vmem>>, %arg8: memref<8x128xf32, #tpu.memory_space<vmem>>) attributes {dimension_semantics = [#tpu.dimension_semantics<parallel>], iteration_bounds = array<i64: 2>, scalar_prefetch = 0 : i64, scratch_operands = 0 : i64, tpu.core_type = #tpu.core_type<tc>, window_params = [{transform_indices = @transform_0, window_bounds = array<i64: 8, 32>}, {transform_indices = @transform_1, window_bounds = array<i64: 8, 3>}, {pipeline_mode = #tpu.pipeline_mode<synchronous>, transform_indices = @transform_2, window_bounds = array<i64: 32, 128>}, {pipeline_mode = #tpu.pipeline_mode<synchronous>, transform_indices = @transform_3, window_bounds = array<i64: 1, 128>}, {pipeline_mode = #tpu.pipeline_mode<synchronous>, transform_indices = @transform_4, window_bounds = array<i64: 1, 128>}, {pipeline_mode = #tpu.pipeline_mode<synchronous>, transform_indices = @transform_5, window_bounds = array<i64: 3, 128>}, {transform_indices = @transform_6, window_bounds = array<i64: 8, 1>}, {transform_indices = @transform_7, window_bounds = array<i64: 8, 128>}]} {
    %c0 = arith.constant 0 : index
    %c0_0 = arith.constant 0 : index
    %0 = vector.load %arg1[%c0, %c0_0] : memref<8x32xf32, #tpu.memory_space<vmem>>, vector<8x32xf32>
    %c0_1 = arith.constant 0 : index
    %c0_2 = arith.constant 0 : index
    %1 = vector.load %arg3[%c0_1, %c0_2] : memref<32x128xf32, #tpu.memory_space<vmem>>, vector<32x128xf32>
    %cst = arith.constant dense<0.000000e+00> : vector<8x128xf32>
    %2 = tpu.matmul %0, %1, %cst {dimension_numbers = #tpu.dot_dimension_numbers<[1], [0], [0], [1], [0, 0, 1, 1], [], []>, precision = #tpu.contract_precision<fp32>} : vector<8x32xf32>, vector<32x128xf32>, vector<8x128xf32> -> vector<8x128xf32>
    %c0_3 = arith.constant 0 : index
    %c0_4 = arith.constant 0 : index
    %3 = vector.load %arg4[%c0_3, %c0_4] : memref<1x128xf32, #tpu.memory_space<vmem>>, vector<1x128xf32>
    %4 = vector.broadcast %3 : vector<1x128xf32> to vector<8x128xf32>
    %5 = arith.addf %2, %4 : vector<8x128xf32>
    %cst_5 = arith.constant dense<0xFF800000> : vector<8xf32>
    %6 = vector.multi_reduction <maximumf>, %5, %cst_5 [1] : vector<8x128xf32> to vector<8xf32>
    %7 = vector.shape_cast %6 : vector<8xf32> to vector<8x1xf32>
    %8 = vector.broadcast %7 : vector<8x1xf32> to vector<8x128xf32>
    %9 = arith.subf %5, %8 : vector<8x128xf32>
    %10 = math.exp %9 : vector<8x128xf32>
    %cst_6 = arith.constant dense<0.000000e+00> : vector<8xf32>
    %11 = vector.multi_reduction <add>, %10, %cst_6 [1] : vector<8x128xf32> to vector<8xf32>
    %12 = vector.shape_cast %11 : vector<8xf32> to vector<8x1xf32>
    %13 = vector.broadcast %12 : vector<8x1xf32> to vector<8x128xf32>
    %14 = arith.divf %10, %13 : vector<8x128xf32>
    %c0_7 = arith.constant 0 : index
    %c0_8 = arith.constant 0 : index
    %15 = vector.load %arg2[%c0_7, %c0_8] : memref<8x3xf32, #tpu.memory_space<vmem>>, vector<8x3xf32>
    %c0_9 = arith.constant 0 : index
    %c0_10 = arith.constant 0 : index
    %16 = vector.load %arg6[%c0_9, %c0_10] : memref<3x128xf32, #tpu.memory_space<vmem>>, vector<3x128xf32>
    %17 = vector.extract_strided_slice %15 {offsets = [0, 0], sizes = [8, 1], strides = [1, 1]} : vector<8x3xf32> to vector<8x1xf32>
    %18 = vector.extract_strided_slice %16 {offsets = [0, 0], sizes = [1, 128], strides = [1, 1]} : vector<3x128xf32> to vector<1x128xf32>
    %19 = vector.broadcast %17 : vector<8x1xf32> to vector<8x128xf32>
    %20 = vector.broadcast %18 : vector<1x128xf32> to vector<8x128xf32>
    %21 = arith.mulf %19, %20 : vector<8x128xf32>
    %22 = vector.extract_strided_slice %15 {offsets = [0, 1], sizes = [8, 1], strides = [1, 1]} : vector<8x3xf32> to vector<8x1xf32>
    %23 = vector.extract_strided_slice %16 {offsets = [1, 0], sizes = [1, 128], strides = [1, 1]} : vector<3x128xf32> to vector<1x128xf32>
    %24 = vector.broadcast %22 : vector<8x1xf32> to vector<8x128xf32>
    %25 = vector.broadcast %23 : vector<1x128xf32> to vector<8x128xf32>
    %26 = arith.mulf %24, %25 : vector<8x128xf32>
    %27 = arith.addf %21, %26 : vector<8x128xf32>
    %28 = vector.extract_strided_slice %15 {offsets = [0, 2], sizes = [8, 1], strides = [1, 1]} : vector<8x3xf32> to vector<8x1xf32>
    %29 = vector.extract_strided_slice %16 {offsets = [2, 0], sizes = [1, 128], strides = [1, 1]} : vector<3x128xf32> to vector<1x128xf32>
    %30 = vector.broadcast %28 : vector<8x1xf32> to vector<8x128xf32>
    %31 = vector.broadcast %29 : vector<1x128xf32> to vector<8x128xf32>
    %32 = arith.mulf %30, %31 : vector<8x128xf32>
    %33 = arith.addf %27, %32 : vector<8x128xf32>
    %c0_11 = arith.constant 0 : index
    %c0_12 = arith.constant 0 : index
    %34 = vector.load %arg5[%c0_11, %c0_12] : memref<1x128xf32, #tpu.memory_space<vmem>>, vector<1x128xf32>
    %35 = math.exp %33 : vector<8x128xf32>
    %36 = vector.broadcast %34 : vector<1x128xf32> to vector<8x128xf32>
    %37 = arith.mulf %36, %35 : vector<8x128xf32>
    %c0_13 = arith.constant 0 : index
    %c0_14 = arith.constant 0 : index
    %38 = vector.load %arg8[%c0_13, %c0_14] : memref<8x128xf32, #tpu.memory_space<vmem>>, vector<8x128xf32>
    tpu.vector_store %arg8[%c0_13, %c0_14], %14 {strides = array<i32>} : memref<8x128xf32, #tpu.memory_space<vmem>>, vector<8x128xf32>,
    %39 = arith.mulf %14, %37 : vector<8x128xf32>
    %cst_15 = arith.constant dense<0.000000e+00> : vector<8xf32>
    %40 = vector.multi_reduction <add>, %39, %cst_15 [1] : vector<8x128xf32> to vector<8xf32>
    %41 = vector.shape_cast %40 : vector<8xf32> to vector<8x1xf32>
    %c0_16 = arith.constant 0 : index
    %c0_17 = arith.constant 0 : index
    %42 = vector.load %arg7[%c0_16, %c0_17] : memref<8x1xf32, #tpu.memory_space<vmem>>, vector<8x1xf32>
    tpu.vector_store %arg7[%c0_16, %c0_17], %41 {strides = array<i32>} : memref<8x1xf32, #tpu.memory_space<vmem>>, vector<8x1xf32>,
    return
  }
  func.func @transform_0(%arg0: i32) -> (i32, i32) {
    %c0_i32 = arith.constant 0 : i32
    %c0_i32_0 = arith.constant 0 : i32
    return %arg0, %c0_i32 : i32, i32
  }
  func.func @transform_1(%arg0: i32) -> (i32, i32) {
    %c0_i32 = arith.constant 0 : i32
    %c0_i32_0 = arith.constant 0 : i32
    return %arg0, %c0_i32 : i32, i32
  }
  func.func @transform_2(%arg0: i32) -> (i32, i32) {
    %c0_i32 = arith.constant 0 : i32
    %c0_i32_0 = arith.constant 0 : i32
    %c0_i32_1 = arith.constant 0 : i32
    return %c0_i32, %c0_i32_0 : i32, i32
  }
  func.func @transform_3(%arg0: i32) -> (i32, i32) {
    %c0_i32 = arith.constant 0 : i32
    %c0_i32_0 = arith.constant 0 : i32
    %c0_i32_1 = arith.constant 0 : i32
    return %c0_i32, %c0_i32_0 : i32, i32
  }
  func.func @transform_4(%arg0: i32) -> (i32, i32) {
    %c0_i32 = arith.constant 0 : i32
    %c0_i32_0 = arith.constant 0 : i32
    %c0_i32_1 = arith.constant 0 : i32
    return %c0_i32, %c0_i32_0 : i32, i32
  }
  func.func @transform_5(%arg0: i32) -> (i32, i32) {
    %c0_i32 = arith.constant 0 : i32
    %c0_i32_0 = arith.constant 0 : i32
    %c0_i32_1 = arith.constant 0 : i32
    return %c0_i32, %c0_i32_0 : i32, i32
  }
  func.func @transform_6(%arg0: i32) -> (i32, i32) {
    %c0_i32 = arith.constant 0 : i32
    %c0_i32_0 = arith.constant 0 : i32
    return %arg0, %c0_i32 : i32, i32
  }
  func.func @transform_7(%arg0: i32) -> (i32, i32) {
    %c0_i32 = arith.constant 0 : i32
    %c0_i32_0 = arith.constant 0 : i32
    return %arg0, %c0_i32 : i32, i32
  }
}

</mosaic_0001>

<llo_original>
// kernel: tpu_custom_call.1
$region0: #{tpu_custom_call.1}
  #allocation0 [shape = 'u32[]', space=smem, size = 0x4, offset = 0x4, fixed_abs, tag = 'smem constant byte address 0x4 - core index']
  #allocation1 [shape = 'u32[144,128]{1,0:T(1,128)}', space=vmem, size = 0x12000, scoped, tag = 'internal scratch']
  %s0 = inlined_call_operand.vmem [shape: f32[16,32], index: 0, kind: input, shape index: {}]
  %s1 = inlined_call_operand.vmem [shape: f32[16,3], index: 1, kind: input, shape index: {}]
  %s2 = inlined_call_operand.hbm [shape: f32[32,128], index: 2, kind: input, shape index: {}]
  %s3 = inlined_call_operand.vmem [shape: f32[1,128], index: 3, kind: input, shape index: {}]
  %s4 = inlined_call_operand.vmem [shape: f32[1,128], index: 4, kind: input, shape index: {}]
  %s5 = inlined_call_operand.vmem [shape: f32[3,128], index: 5, kind: input, shape index: {}]
  %s6 = inlined_call_operand.vmem [shape: f32[16,1], index: 6, kind: output, shape index: {0}]
  %s7 = inlined_call_operand.hbm [shape: f32[16,128], index: 7, kind: output, shape index: {1}]
  %8 = xla_tuple %s6, %s7
  %s9 = sld [smem:[#allocation0]]
  $region69: #{tpu_custom_call.1} parent=0
    _
  %s11 = ssub.s32 1, %s9
  %s12 = scalar_select 0, %s11, %s9
  $region1: #{tpu_custom_call.1} parent=0
    #allocation2 [shape = 'u8[16384]{0}', space=vmem, size = 0x4000, scoped, tag = 'input window, operand 2, single buffered']
    #allocation3 [shape = 's32[2]{0}', space=sflag, size = 0x8, scoped, tag = 'scoped memory for tpu_custom_call.1']
    #allocation4 [shape = 's32[2]{0}', space=sflag, size = 0x8, scoped, tag = 'scoped memory for tpu_custom_call.1']
    #allocation5 [shape = 'u8[8192]{0}', space=vmem, size = 0x2000, scoped, tag = 'output window, operand 1']
    %13 = vsyncpa [#allocation3], 0
    %14 = vsyncpa [#allocation4], 0
    %s15 = scalar_lea.sflag [#allocation4], 1
    %16 = vsyncpa %s15, 0
    loop: start=0, step=1, limit=4
    $region2: #{tpu_custom_call.1} parent=1 // loop_pre_header
      _
    $region3: #{tpu_custom_call.1} parent=1 // loop_header
      %s18 = sphi 0, %s22
      %p19 = scmp.ge.s32.totalorder %s18, 4
      %s28 = sphi 0, %s30
      %s31 = sphi 0, %s28
      %s32 = sphi 0, %s31
      %s48 = sphi 0, %s32
      %s54 = sphi 0, %s56
      %s57 = sphi 0, %s54
      %s58 = sphi 0, %s57
      %s74 = sphi 0, %s58
      %s78 = sphi 0, %s78
      %s80 = sphi 0, %s78
      %s81 = sphi 0, %s80
      %s95 = sphi 0, %s81
      %s99 = sphi 0, %s99
      %s101 = sphi 0, %s99
      %s102 = sphi 0, %s101
      %s116 = sphi 0, %s102
      %s120 = sphi 0, %s120
      %s122 = sphi 0, %s120
      %s123 = sphi 0, %s122
      %s137 = sphi 0, %s123
      %s141 = sphi 0, %s141
      %s143 = sphi 0, %s141
      %s144 = sphi 0, %s143
      %s158 = sphi 0, %s144
      %s164 = sphi 0, %s166
      %s167 = sphi 0, %s164
      %s168 = sphi 0, %s167
      %s184 = sphi 0, %s168
      %s190 = sphi 0, %s192
      %s193 = sphi 0, %s190
      %s194 = sphi 0, %s193
      %s210 = sphi 0, %s194
    $region4: #{tpu_custom_call.1} parent=1 // loop_header_branch
      %21 = sbr.rel (%p19) target = $region8
    $region5: #{tpu_custom_call.1} parent=1 // loop_body
      %s23 = ssub.s32 %s18, 1
      %s24 = ssub.s32 %s18, 2
      %s25 = sadd.s32 %s18, 1
      %s26 = ssub.s32 %s18, %s25
      %p27 = scmp.eq.s32.totalorder %s26, 0
      %s29 = sadd.s32 %s28, 1
      %s30 = scalar_select %p27, %s28, %s29
      %p33 = pneg %p27
      %p34 = scmp.eq.s32.totalorder %s18, 1
      %p35 = por %p33, %p34
      %p36 = scmp.ne.s32.totalorder %s28, %s31
      %p37 = scmp.eq.s32.totalorder %s18, 0
      %p38 = por %p36, %p37
      %p39 = scmp.ne.s32.totalorder %s28, %s31
      %p40 = scmp.eq.s32.totalorder %s23, 1
      %p41 = por %p39, %p40
      %p42 = scmp.ne.s32.totalorder %s31, %s32
      %p43 = scmp.eq.s32.totalorder %s23, 0
      %p44 = por %p42, %p43
      %p45 = scmp.ne.s32.totalorder %s31, %s32
      %p46 = scmp.eq.s32.totalorder %s24, 1
      %p47 = por %p45, %p46
      %p49 = scmp.ne.s32.totalorder %s32, %s48
      %p50 = scmp.eq.s32.totalorder %s24, 0
      %p51 = por %p49, %p50
      %s52 = ssub.s32 %s18, %s25
      %p53 = scmp.eq.s32.totalorder %s52, 0
      %s55 = sadd.s32 %s54, 1
      %s56 = scalar_select %p53, %s54, %s55
      %p59 = pneg %p53
      %p60 = scmp.eq.s32.totalorder %s18, 1
      %p61 = por %p59, %p60
      %p62 = scmp.ne.s32.totalorder %s54, %s57
      %p63 = scmp.eq.s32.totalorder %s18, 0
      %p64 = por %p62, %p63
      %p65 = scmp.ne.s32.totalorder %s54, %s57
      %p66 = scmp.eq.s32.totalorder %s23, 1
      %p67 = por %p65, %p66
      %p68 = scmp.ne.s32.totalorder %s57, %s58
      %p69 = scmp.eq.s32.totalorder %s23, 0
      %p70 = por %p68, %p69
      %p71 = scmp.ne.s32.totalorder %s57, %s58
      %p72 = scmp.eq.s32.totalorder %s24, 1
      %p73 = por %p71, %p72
      %p75 = scmp.ne.s32.totalorder %s58, %s74
      %p76 = scmp.eq.s32.totalorder %s24, 0
      %p77 = por %p75, %p76
      %s79 = sadd.s32 %s78, 1
      %p82 = scmp.eq.s32.totalorder %s18, 1
      %p83 = scmp.ne.s32.totalorder %s78, %s80
      %p84 = scmp.eq.s32.totalorder %s18, 0
      %p85 = por %p83, %p84
      %p86 = scmp.ne.s32.totalorder %s78, %s80
      %p87 = scmp.eq.s32.totalorder %s23, 1
      %p88 = por %p86, %p87
      %p89 = scmp.ne.s32.totalorder %s80, %s81
      %p90 = scmp.eq.s32.totalorder %s23, 0
      %p91 = por %p89, %p90
      %p92 = scmp.ne.s32.totalorder %s80, %s81
      %p93 = scmp.eq.s32.totalorder %s24, 1
      %p94 = por %p92, %p93
      %p96 = scmp.ne.s32.totalorder %s81, %s95
      %p97 = scmp.eq.s32.totalorder %s24, 0
      %p98 = por %p96, %p97
      %s100 = sadd.s32 %s99, 1
      %p103 = scmp.eq.s32.totalorder %s18, 1
      %p104 = scmp.ne.s32.totalorder %s99, %s101
      %p105 = scmp.eq.s32.totalorder %s18, 0
      %p106 = por %p104, %p105
      %p107 = scmp.ne.s32.totalorder %s99, %s101
      %p108 = scmp.eq.s32.totalorder %s23, 1
      %p109 = por %p107, %p108
      %p110 = scmp.ne.s32.totalorder %s101, %s102
      %p111 = scmp.eq.s32.totalorder %s23, 0
      %p112 = por %p110, %p111
      %p113 = scmp.ne.s32.totalorder %s101, %s102
      %p114 = scmp.eq.s32.totalorder %s24, 1
      %p115 = por %p113, %p114
      %p117 = scmp.ne.s32.totalorder %s102, %s116
      %p118 = scmp.eq.s32.totalorder %s24, 0
      %p119 = por %p117, %p118
      %s121 = sadd.s32 %s120, 1
      %p124 = scmp.eq.s32.totalorder %s18, 1
      %p125 = scmp.ne.s32.totalorder %s120, %s122
      %p126 = scmp.eq.s32.totalorder %s18, 0
      %p127 = por %p125, %p126
      %p128 = scmp.ne.s32.totalorder %s120, %s122
      %p129 = scmp.eq.s32.totalorder %s23, 1
      %p130 = por %p128, %p129
      %p131 = scmp.ne.s32.totalorder %s122, %s123
      %p132 = scmp.eq.s32.totalorder %s23, 0
      %p133 = por %p131, %p132
      %p134 = scmp.ne.s32.totalorder %s122, %s123
      %p135 = scmp.eq.s32.totalorder %s24, 1
      %p136 = por %p134, %p135
      %p138 = scmp.ne.s32.totalorder %s123, %s137
      %p139 = scmp.eq.s32.totalorder %s24, 0
      %p140 = por %p138, %p139
      %s142 = sadd.s32 %s141, 1
      %p145 = scmp.eq.s32.totalorder %s18, 1
      %p146 = scmp.ne.s32.totalorder %s141, %s143
      %p147 = scmp.eq.s32.totalorder %s18, 0
      %p148 = por %p146, %p147
      %p149 = scmp.ne.s32.totalorder %s141, %s143
      %p150 = scmp.eq.s32.totalorder %s23, 1
      %p151 = por %p149, %p150
      %p152 = scmp.ne.s32.totalorder %s143, %s144
      %p153 = scmp.eq.s32.totalorder %s23, 0
      %p154 = por %p152, %p153
      %p155 = scmp.ne.s32.totalorder %s143, %s144
      %p156 = scmp.eq.s32.totalorder %s24, 1
      %p157 = por %p155, %p156
      %p159 = scmp.ne.s32.totalorder %s144, %s158
      %p160 = scmp.eq.s32.totalorder %s24, 0
      %p161 = por %p159, %p160
      %s162 = ssub.s32 %s18, %s25
      %p163 = scmp.eq.s32.totalorder %s162, 0
      %s165 = sadd.s32 %s164, 1
      %s166 = scalar_select %p163, %s164, %s165
      %p169 = pneg %p163
      %p170 = scmp.eq.s32.totalorder %s18, 1
      %p171 = por %p169, %p170
      %p172 = scmp.ne.s32.totalorder %s164, %s167
      %p173 = scmp.eq.s32.totalorder %s18, 0
      %p174 = por %p172, %p173
      %p175 = scmp.ne.s32.totalorder %s164, %s167
      %p176 = scmp.eq.s32.totalorder %s23, 1
      %p177 = por %p175, %p176
      %p178 = scmp.ne.s32.totalorder %s167, %s168
      %p179 = scmp.eq.s32.totalorder %s23, 0
      %p180 = por %p178, %p179
      %p181 = scmp.ne.s32.totalorder %s167, %s168
      %p182 = scmp.eq.s32.totalorder %s24, 1
      %p183 = por %p181, %p182
      %p185 = scmp.ne.s32.totalorder %s168, %s184
      %p186 = scmp.eq.s32.totalorder %s24, 0
      %p187 = por %p185, %p186
      %s188 = ssub.s32 %s18, %s25
      %p189 = scmp.eq.s32.totalorder %s188, 0
      %s191 = sadd.s32 %s190, 1
      %s192 = scalar_select %p189, %s190, %s191
      %p195 = pneg %p189
      %p196 = scmp.eq.s32.totalorder %s18, 1
      %p197 = por %p195, %p196
      %p198 = scmp.ne.s32.totalorder %s190, %s193
      %p199 = scmp.eq.s32.totalorder %s18, 0
      %p200 = por %p198, %p199
      %p201 = scmp.ne.s32.totalorder %s190, %s193
      %p202 = scmp.eq.s32.totalorder %s23, 1
      %p203 = por %p201, %p202
      %p204 = scmp.ne.s32.totalorder %s193, %s194
      %p205 = scmp.eq.s32.totalorder %s23, 0
      %p206 = por %p204, %p205
      %p207 = scmp.ne.s32.totalorder %s193, %s194
      %p208 = scmp.eq.s32.totalorder %s24, 1
      %p209 = por %p207, %p208
      %p211 = scmp.ne.s32.totalorder %s194, %s210
      %p212 = scmp.eq.s32.totalorder %s24, 0
      %p213 = por %p211, %p212
      %p214 = scmp.le.s32.totalorder 1, %s18
      %p215 = scmp.lt.s32.totalorder %s18, 3
      %p216 = pnand %p214, %p215
      %p217 = pneg %p216
      // Predicated region
      $region9: #{tpu_custom_call.1} parent=5 // pred_check
        _
      $region10: #{tpu_custom_call.1} parent=5 // pred_check_branch
        %219 = sbr.rel (%p216) target = $region12
      $region11: #{tpu_custom_call.1} parent=5 // pred_region
        %s220 = ssub.s32 %s18, 1
        // Predicated region
        $region13: #{tpu_custom_call.1} parent=11 // pred_check
          %p221 = pneg %p91
        $region14: #{tpu_custom_call.1} parent=11 // pred_check_branch
          %223 = sbr.rel (%p221) target = $region16
        $region15: #{tpu_custom_call.1} parent=11 // pred_region
          %s225 = ssub.s32 512, 512
          %226 = vsyncadd [#allocation3], %s225
          %s227 = sshll.u32 [#allocation2], 4
          %s228 = int_to_ptr.vmem [resolvable:$true] %s227
          %233 = dma.hbm_to_vmem [thread:$0]  %s2, 512, %s228, [#allocation3], 128, 128, 8
        $region16: #{tpu_custom_call.1} parent=11 // pred_fallthru
          _
        // Predicated region
        $region17: #{tpu_custom_call.1} parent=11 // pred_check
          %p234 = pneg %p112
        $region18: #{tpu_custom_call.1} parent=11 // pred_check_branch
          %236 = sbr.rel (%p234) target = $region20
        $region19: #{tpu_custom_call.1} parent=11 // pred_region
          _
        $region20: #{tpu_custom_call.1} parent=11 // pred_fallthru
          _
        // Predicated region
        $region21: #{tpu_custom_call.1} parent=11 // pred_check
          %p237 = pneg %p133
        $region22: #{tpu_custom_call.1} parent=11 // pred_check_branch
          %239 = sbr.rel (%p237) target = $region24
        $region23: #{tpu_custom_call.1} parent=11 // pred_region
          _
        $region24: #{tpu_custom_call.1} parent=11 // pred_fallthru
          _
        // Predicated region
        $region25: #{tpu_custom_call.1} parent=11 // pred_check
          %p240 = pneg %p154
        $region26: #{tpu_custom_call.1} parent=11 // pred_check_branch
          %242 = sbr.rel (%p240) target = $region28
        $region27: #{tpu_custom_call.1} parent=11 // pred_region
          _
        $region28: #{tpu_custom_call.1} parent=11 // pred_fallthru
          _
      $region12: #{tpu_custom_call.1} parent=5 // pred_fallthru
        _
      %p243 = scmp.lt.s32.totalorder %s18, 2
      // Predicated region
      $region29: #{tpu_custom_call.1} parent=5 // pred_check
        %p244 = pneg %p243
      $region30: #{tpu_custom_call.1} parent=5 // pred_check_branch
        %246 = sbr.rel (%p244) target = $region32
      $region31: #{tpu_custom_call.1} parent=5 // pred_region
        // Predicated region
        $region33: #{tpu_custom_call.1} parent=31 // pred_check
          %p247 = pneg %p38
        $region34: #{tpu_custom_call.1} parent=31 // pred_check_branch
          %249 = sbr.rel (%p247) target = $region36
        $region35: #{tpu_custom_call.1} parent=31 // pred_region
          %p250 = scmp.lt.s32.totalorder %s18, 1
          %s251 = scalar_select %p250, %s18, 1
          %s252 = smul.addr %s251, 8
          %s253 = scalar_lea.vmem %s0, %s252
        $region36: #{tpu_custom_call.1} parent=31 // pred_fallthru
          _
        // Predicated region
        $region37: #{tpu_custom_call.1} parent=31 // pred_check
          %p254 = pneg %p64
        $region38: #{tpu_custom_call.1} parent=31 // pred_check_branch
          %256 = sbr.rel (%p254) target = $region40
        $region39: #{tpu_custom_call.1} parent=31 // pred_region
          %p257 = scmp.lt.s32.totalorder %s18, 1
          %s258 = scalar_select %p257, %s18, 1
          %s259 = smul.addr %s258, 8
          %s260 = scalar_lea.vmem %s1, %s259
        $region40: #{tpu_custom_call.1} parent=31 // pred_fallthru
          _
      $region32: #{tpu_custom_call.1} parent=5 // pred_fallthru
        _
      %p261 = scmp.le.s32.totalorder 1, %s18
      %p262 = scmp.lt.s32.totalorder %s18, 3
      %p263 = pnand %p261, %p262
      %p264 = pneg %p263
      // Predicated region
      $region41: #{tpu_custom_call.1} parent=5 // pred_check
        _
      $region42: #{tpu_custom_call.1} parent=5 // pred_check_branch
        %266 = sbr.rel (%p263) target = $region44
      $region43: #{tpu_custom_call.1} parent=5 // pred_region
        %s267 = ssub.s32 %s18, 1
        // Predicated region
        $region45: #{tpu_custom_call.1} parent=43 // pred_check
          %p268 = pneg %p91
        $region46: #{tpu_custom_call.1} parent=43 // pred_check_branch
          %270 = sbr.rel (%p268) target = $region48
        $region47: #{tpu_custom_call.1} parent=43 // pred_region
          %271 = dma.done [#allocation3], 512
        $region48: #{tpu_custom_call.1} parent=43 // pred_fallthru
          _
        %p272 = scmp.lt.s32.totalorder %s23, 1
        %s273 = scalar_select %p272, %s23, 1
        %s274 = smul.addr %s273, 8
        %s275 = scalar_lea.vmem %s0, %s274
        %p276 = pneg %p44
        %p277 = pneg %p41
        %p278 = scmp.lt.s32.totalorder %s23, 1
        %s279 = scalar_select %p278, %s23, 1
        %s280 = smul.addr %s279, 8
        %s281 = scalar_lea.vmem %s1, %s280
        %p282 = pneg %p70
        %p283 = pneg %p67
        %p284 = pneg %p91
        %p285 = pneg %p88
        %p286 = pneg %p112
        %p287 = pneg %p109
        %p288 = pneg %p133
        %p289 = pneg %p130
        %p290 = pneg %p154
        %p291 = pneg %p151
        %p292 = pneg %p180
        %p293 = pneg %p177
        %p294 = scmp.lt.s32.totalorder %s23, 1
        %s295 = scalar_select %p294, %s23, 1
        %s296 = smul.addr %s295, 8
        %s297 = scalar_lea.vmem %s6, %s296
        %p298 = pneg %p206
        %p299 = pneg %p203
        %s300 = sand.u32 %s193, 1
        %s301 = scalar_lea.sflag [#allocation4], %s300
        %s302 = sand.u32 %s193, 1
        %s303 = smul.addr %s302, 8
        %s304 = scalar_lea.vmem [#allocation5], %s303
        %p305 = scmp.lt.s32.totalorder %s23, 1
        %s306 = scalar_select %p305, %s23, 1
        %s307 = smul.addr %s306, 8
        %s308 = scalar_lea.vmem %s0, %s307
        %p309 = scmp.lt.s32.totalorder %s23, 1
        %s310 = scalar_select %p309, %s23, 1
        %s311 = smul.addr %s310, 8
        %s312 = scalar_lea.vmem %s1, %s311
        %p313 = scmp.lt.s32.totalorder %s23, 1
        %s314 = scalar_select %p313, %s23, 1
        %s315 = smul.addr %s314, 8
        %s316 = scalar_lea.vmem %s6, %s315
        %v317 = vld [vmem:[%s308] sm:$0xff]
        %v318 = vld [vmem:[#allocation2] sm:$0xff]
        %v319 = vld [vmem:[#allocation2 + $0x8] sm:$0xff]
        %v320 = vld [vmem:[#allocation2 + $0x10] sm:$0xff]
        %v321 = vld [vmem:[#allocation2 + $0x18] sm:$0xff]
        %v322 = vld [vmem:[%s3] sm:$0x1]
        %v324 = vlaneseq
        %v325 = vshrl.u32 %v324, 7
        %v326 = vsub.s32 0, %v325
        %v327 = vrot.slane %v322, %v326
        %vm329 = vcmask 261120
        %v331 = vsel %vm329, %v317, 0
        %333 = vmatprep.subr.mxu0 0.0
        %v334 = vand.u32 %v318, 4294901760
        %335 = vmatpush1.msra.mxu0 %v334
        %336 = vmatprep.subr.mxu0 0.0
        %v337 = vand.u32 %v319, 4294901760
        %338 = vmatpush1.msra.mxu0 %v337
        %339 = vmatprep.subr.mxu0 0.0
        %v340 = vand.u32 %v320, 4294901760
        %341 = vmatpush1.msra.mxu0 %v340
        %342 = vmatprep.subr.mxu0 0.0
        %v343 = vand.u32 %v321, 4294901760
        %344 = vmatpush1.msra.mxu0 %v343
        %345 = vmatprep.subr.mxu0 0.0
        %346 = vmatpush1.msra.mxu0 0.0
        %347 = vmatprep.subr.mxu0 0.0
        %348 = vmatpush1.msra.mxu0 0.0
        %349 = vmatprep.subr.mxu0 0.0
        %350 = vmatpush1.msra.mxu0 0.0
        %351 = vmatprep.subr.mxu0 0.0
        %352 = vmatpush1.msra.mxu0 0.0
        %353 = vmatprep.subr.mxu0 0.0
        %354 = vmatpush1.msra.mxu0 0.0
        %355 = vmatprep.subr.mxu0 0.0
        %356 = vmatpush1.msra.mxu0 0.0
        %357 = vmatprep.subr.mxu0 0.0
        %358 = vmatpush1.msra.mxu0 0.0
        %359 = vmatprep.subr.mxu0 0.0
        %360 = vmatpush1.msra.mxu0 0.0
        %361 = vmatprep.subr.mxu0 0.0
        %362 = vmatpush1.msra.mxu0 0.0
        %363 = vmatprep.subr.mxu0 0.0
        %364 = vmatpush1.msra.mxu0 0.0
        %365 = vmatprep.subr.mxu0 0.0
        %366 = vmatpush1.msra.mxu0 0.0
        %367 = vmatprep.subr.mxu0 0.0
        %368 = vmatpush1.msra.mxu0 0.0
        %369 = vmatprep.subr.mxu0 0.0
        %370 = vmatpush1.msra.mxu0 0.0
        %371 = vmatprep.subr.mxu0 0.0
        %372 = vmatpush1.msra.mxu0 0.0
        %373 = vmatprep.subr.mxu0 0.0
        %374 = vmatpush1.msra.mxu0 0.0
        %375 = vmatprep.subr.mxu0 0.0
        %376 = vmatpush1.msra.mxu0 0.0
        %377 = vmatprep.subr.mxu0 0.0
        %378 = vmatpush1.msra.mxu0 0.0
        %379 = vmatprep.subr.mxu0 0.0
        %380 = vmatpush1.msra.mxu0 0.0
        %381 = vmatprep.subr.mxu0 0.0
        %382 = vmatpush1.msra.mxu0 0.0
        %383 = vmatprep.subr.mxu0 0.0
        %384 = vmatpush1.msra.mxu0 0.0
        %385 = vmatprep.subr.mxu0 0.0
        %386 = vmatpush1.msra.mxu0 0.0
        %387 = vmatprep.subr.mxu0 0.0
        %388 = vmatpush1.msra.mxu0 0.0
        %389 = vmatprep.subr.mxu0 0.0
        %390 = vmatpush1.msra.mxu0 0.0
        %391 = vmatprep.subr.mxu0 0.0
        %392 = vmatpush1.msra.mxu0 0.0
        %393 = vmatprep.subr.mxu0 0.0
        %394 = vmatpush1.msra.mxu0 0.0
        %395 = vmatprep.subr.mxu0 0.0
        %396 = vmatpush1.msra.mxu0 0.0
        %397 = vmatprep.subr.mxu0 0.0
        %398 = vmatpush1.msra.mxu0 0.0
        %399 = vmatprep.subr.mxu0 0.0
        %400 = vmatpush1.msra.mxu0 0.0
        %401 = vmatprep.mubr.f32.mxu0 0.0
        %v402 = vand.u32 %v331, 4294901760
        %v403 = vsub.f32 %v331, %v402
        %v404 = vand.u32 %v403, 4294901760
        %v405 = vsub.f32 %v403, %v404
        %v406 = vand.u32 %v405, 4294901760
        %407 = vmatmul.mubr.f32.gmra.mrb[0].mxu0 %v406
        %v408 = vpop.f32.mrb[0].mxu0
        %v409 = vadd.f32 %v327, %v408
        %v410 = vpop.f32.mrb[0].mxu0
        %411 = vdwg.mxu0
        %412 = vmatprep.subr.mxu0 0.0
        %v413 = vand.u32 %v318, 4294901760
        %v414 = vsub.f32 %v318, %v413
        %v415 = vand.u32 %v414, 4294901760
        %v416 = vsub.f32 %v414, %v415
        %v417 = vand.u32 %v416, 4294901760
        %418 = vmatpush1.msra.mxu0 %v417
        %419 = vmatprep.subr.mxu0 0.0
        %v420 = vand.u32 %v319, 4294901760
        %v421 = vsub.f32 %v319, %v420
        %v422 = vand.u32 %v421, 4294901760
        %v423 = vsub.f32 %v421, %v422
        %v424 = vand.u32 %v423, 4294901760
        %425 = vmatpush1.msra.mxu0 %v424
        %426 = vmatprep.subr.mxu0 0.0
        %v427 = vand.u32 %v320, 4294901760
        %v428 = vsub.f32 %v320, %v427
        %v429 = vand.u32 %v428, 4294901760
        %v430 = vsub.f32 %v428, %v429
        %v431 = vand.u32 %v430, 4294901760
        %432 = vmatpush1.msra.mxu0 %v431
        %433 = vmatprep.subr.mxu0 0.0
        %v434 = vand.u32 %v321, 4294901760
        %v435 = vsub.f32 %v321, %v434
        %v436 = vand.u32 %v435, 4294901760
        %v437 = vsub.f32 %v435, %v436
        %v438 = vand.u32 %v437, 4294901760
        %439 = vmatpush1.msra.mxu0 %v438
        %440 = vmatprep.subr.mxu0 0.0
        %441 = vmatpush1.msra.mxu0 0.0
        %442 = vmatprep.subr.mxu0 0.0
        %443 = vmatpush1.msra.mxu0 0.0
        %444 = vmatprep.subr.mxu0 0.0
        %445 = vmatpush1.msra.mxu0 0.0
        %446 = vmatprep.subr.mxu0 0.0
        %447 = vmatpush1.msra.mxu0 0.0
        %448 = vmatprep.subr.mxu0 0.0
        %449 = vmatpush1.msra.mxu0 0.0
        %450 = vmatprep.subr.mxu0 0.0
        %451 = vmatpush1.msra.mxu0 0.0
        %452 = vmatprep.subr.mxu0 0.0
        %453 = vmatpush1.msra.mxu0 0.0
        %454 = vmatprep.subr.mxu0 0.0
        %455 = vmatpush1.msra.mxu0 0.0
        %456 = vmatprep.subr.mxu0 0.0
        %457 = vmatpush1.msra.mxu0 0.0
        %458 = vmatprep.subr.mxu0 0.0
        %459 = vmatpush1.msra.mxu0 0.0
        %460 = vmatprep.subr.mxu0 0.0
        %461 = vmatpush1.msra.mxu0 0.0
        %462 = vmatprep.subr.mxu0 0.0
        %463 = vmatpush1.msra.mxu0 0.0
        %464 = vmatprep.subr.mxu0 0.0
        %465 = vmatpush1.msra.mxu0 0.0
        %466 = vmatprep.subr.mxu0 0.0
        %467 = vmatpush1.msra.mxu0 0.0
        %468 = vmatprep.subr.mxu0 0.0
        %469 = vmatpush1.msra.mxu0 0.0
        %470 = vmatprep.subr.mxu0 0.0
        %471 = vmatpush1.msra.mxu0 0.0
        %472 = vmatprep.subr.mxu0 0.0
        %473 = vmatpush1.msra.mxu0 0.0
        %474 = vmatprep.subr.mxu0 0.0
        %475 = vmatpush1.msra.mxu0 0.0
        %476 = vmatprep.subr.mxu0 0.0
        %477 = vmatpush1.msra.mxu0 0.0
        %478 = vmatprep.subr.mxu0 0.0
        %479 = vmatpush1.msra.mxu0 0.0
        %480 = vmatprep.subr.mxu0 0.0
        %481 = vmatpush1.msra.mxu0 0.0
        %482 = vmatprep.subr.mxu0 0.0
        %483 = vmatpush1.msra.mxu0 0.0
        %484 = vmatprep.subr.mxu0 0.0
        %485 = vmatpush1.msra.mxu0 0.0
        %486 = vmatprep.subr.mxu0 0.0
        %487 = vmatpush1.msra.mxu0 0.0
        %488 = vmatprep.subr.mxu0 0.0
        %489 = vmatpush1.msra.mxu0 0.0
        %490 = vmatprep.subr.mxu0 0.0
        %491 = vmatpush1.msra.mxu0 0.0
        %492 = vmatprep.subr.mxu0 0.0
        %493 = vmatpush1.msra.mxu0 0.0
        %494 = vmatprep.subr.mxu0 0.0
        %495 = vmatpush1.msra.mxu0 0.0
        %496 = vmatprep.mubr.f32.mxu0 0.0
        %v497 = vand.u32 %v331, 4294901760
        %498 = vmatmul.mubr.f32.gmra.mrb[0].mxu0 %v497
        %v499 = vpop.f32.mrb[0].mxu0
        %v500 = vadd.f32 %v409, %v499
        %v501 = vpop.f32.mrb[0].mxu0
        %502 = vdwg.mxu0
        %503 = vmatprep.subr.mxu0 0.0
        %v504 = vand.u32 %v318, 4294901760
        %v505 = vsub.f32 %v318, %v504
        %506 = vmatpush1.msra.mxu0 %v505
        %507 = vmatprep.subr.mxu0 0.0
        %v508 = vand.u32 %v319, 4294901760
        %v509 = vsub.f32 %v319, %v508
        %510 = vmatpush1.msra.mxu0 %v509
        %511 = vmatprep.subr.mxu0 0.0
        %v512 = vand.u32 %v320, 4294901760
        %v513 = vsub.f32 %v320, %v512
        %514 = vmatpush1.msra.mxu0 %v513
        %515 = vmatprep.subr.mxu0 0.0
        %v516 = vand.u32 %v321, 4294901760
        %v517 = vsub.f32 %v321, %v516
        %518 = vmatpush1.msra.mxu0 %v517
        %519 = vmatprep.subr.mxu0 0.0
        %520 = vmatpush1.msra.mxu0 0.0
        %521 = vmatprep.subr.mxu0 0.0
        %522 = vmatpush1.msra.mxu0 0.0
        %523 = vmatprep.subr.mxu0 0.0
        %524 = vmatpush1.msra.mxu0 0.0
        %525 = vmatprep.subr.mxu0 0.0
        %526 = vmatpush1.msra.mxu0 0.0
        %527 = vmatprep.subr.mxu0 0.0
        %528 = vmatpush1.msra.mxu0 0.0
        %529 = vmatprep.subr.mxu0 0.0
        %530 = vmatpush1.msra.mxu0 0.0
        %531 = vmatprep.subr.mxu0 0.0
        %532 = vmatpush1.msra.mxu0 0.0
        %533 = vmatprep.subr.mxu0 0.0
        %534 = vmatpush1.msra.mxu0 0.0
        %535 = vmatprep.subr.mxu0 0.0
        %536 = vmatpush1.msra.mxu0 0.0
        %537 = vmatprep.subr.mxu0 0.0
        %538 = vmatpush1.msra.mxu0 0.0
        %539 = vmatprep.subr.mxu0 0.0
        %540 = vmatpush1.msra.mxu0 0.0
        %541 = vmatprep.subr.mxu0 0.0
        %542 = vmatpush1.msra.mxu0 0.0
        %543 = vmatprep.subr.mxu0 0.0
        %544 = vmatpush1.msra.mxu0 0.0
        %545 = vmatprep.subr.mxu0 0.0
        %546 = vmatpush1.msra.mxu0 0.0
        %547 = vmatprep.subr.mxu0 0.0
        %548 = vmatpush1.msra.mxu0 0.0
        %549 = vmatprep.subr.mxu0 0.0
        %550 = vmatpush1.msra.mxu0 0.0
        %551 = vmatprep.subr.mxu0 0.0
        %552 = vmatpush1.msra.mxu0 0.0
        %553 = vmatprep.subr.mxu0 0.0
        %554 = vmatpush1.msra.mxu0 0.0
        %555 = vmatprep.subr.mxu0 0.0
        %556 = vmatpush1.msra.mxu0 0.0
        %557 = vmatprep.subr.mxu0 0.0
        %558 = vmatpush1.msra.mxu0 0.0
        %559 = vmatprep.subr.mxu0 0.0
        %560 = vmatpush1.msra.mxu0 0.0
        %561 = vmatprep.subr.mxu0 0.0
        %562 = vmatpush1.msra.mxu0 0.0
        %563 = vmatprep.subr.mxu0 0.0
        %564 = vmatpush1.msra.mxu0 0.0
        %565 = vmatprep.subr.mxu0 0.0
        %566 = vmatpush1.msra.mxu0 0.0
        %567 = vmatprep.subr.mxu0 0.0
        %568 = vmatpush1.msra.mxu0 0.0
        %569 = vmatprep.subr.mxu0 0.0
        %570 = vmatpush1.msra.mxu0 0.0
        %571 = vmatprep.subr.mxu0 0.0
        %572 = vmatpush1.msra.mxu0 0.0
        %573 = vmatprep.subr.mxu0 0.0
        %574 = vmatpush1.msra.mxu0 0.0
        %575 = vmatprep.mubr.f32.mxu0 0.0
        %v576 = vand.u32 %v331, 4294901760
        %v577 = vsub.f32 %v331, %v576
        %578 = vmatmul.mubr.f32.gmra.mrb[0].mxu0 %v577
        %v579 = vpop.f32.mrb[0].mxu0
        %v580 = vadd.f32 %v500, %v579
        %v581 = vpop.f32.mrb[0].mxu0
        %582 = vdwg.mxu0
        %583 = vmatprep.subr.mxu0 0.0
        %v584 = vand.u32 %v318, 4294901760
        %585 = vmatpush1.msra.mxu0 %v584
        %586 = vmatprep.subr.mxu0 0.0
        %v587 = vand.u32 %v319, 4294901760
        %588 = vmatpush1.msra.mxu0 %v587
        %589 = vmatprep.subr.mxu0 0.0
        %v590 = vand.u32 %v320, 4294901760
        %591 = vmatpush1.msra.mxu0 %v590
        %592 = vmatprep.subr.mxu0 0.0
        %v593 = vand.u32 %v321, 4294901760
        %594 = vmatpush1.msra.mxu0 %v593
        %595 = vmatprep.subr.mxu0 0.0
        %596 = vmatpush1.msra.mxu0 0.0
        %597 = vmatprep.subr.mxu0 0.0
        %598 = vmatpush1.msra.mxu0 0.0
        %599 = vmatprep.subr.mxu0 0.0
        %600 = vmatpush1.msra.mxu0 0.0
        %601 = vmatprep.subr.mxu0 0.0
        %602 = vmatpush1.msra.mxu0 0.0
        %603 = vmatprep.subr.mxu0 0.0
        %604 = vmatpush1.msra.mxu0 0.0
        %605 = vmatprep.subr.mxu0 0.0
        %606 = vmatpush1.msra.mxu0 0.0
        %607 = vmatprep.subr.mxu0 0.0
        %608 = vmatpush1.msra.mxu0 0.0
        %609 = vmatprep.subr.mxu0 0.0
        %610 = vmatpush1.msra.mxu0 0.0
        %611 = vmatprep.subr.mxu0 0.0
        %612 = vmatpush1.msra.mxu0 0.0
        %613 = vmatprep.subr.mxu0 0.0
        %614 = vmatpush1.msra.mxu0 0.0
        %615 = vmatprep.subr.mxu0 0.0
        %616 = vmatpush1.msra.mxu0 0.0
        %617 = vmatprep.subr.mxu0 0.0
        %618 = vmatpush1.msra.mxu0 0.0
        %619 = vmatprep.subr.mxu0 0.0
        %620 = vmatpush1.msra.mxu0 0.0
        %621 = vmatprep.subr.mxu0 0.0
        %622 = vmatpush1.msra.mxu0 0.0
        %623 = vmatprep.subr.mxu0 0.0
        %624 = vmatpush1.msra.mxu0 0.0
        %625 = vmatprep.subr.mxu0 0.0
        %626 = vmatpush1.msra.mxu0 0.0
        %627 = vmatprep.subr.mxu0 0.0
        %628 = vmatpush1.msra.mxu0 0.0
        %629 = vmatprep.subr.mxu0 0.0
        %630 = vmatpush1.msra.mxu0 0.0
        %631 = vmatprep.subr.mxu0 0.0
        %632 = vmatpush1.msra.mxu0 0.0
        %633 = vmatprep.subr.mxu0 0.0
        %634 = vmatpush1.msra.mxu0 0.0
        %635 = vmatprep.subr.mxu0 0.0
        %636 = vmatpush1.msra.mxu0 0.0
        %637 = vmatprep.subr.mxu0 0.0
        %638 = vmatpush1.msra.mxu0 0.0
        %639 = vmatprep.subr.mxu0 0.0
        %640 = vmatpush1.msra.mxu0 0.0
        %641 = vmatprep.subr.mxu0 0.0
        %642 = vmatpush1.msra.mxu0 0.0
        %643 = vmatprep.subr.mxu0 0.0
        %644 = vmatpush1.msra.mxu0 0.0
        %645 = vmatprep.subr.mxu0 0.0
        %646 = vmatpush1.msra.mxu0 0.0
        %647 = vmatprep.subr.mxu0 0.0
        %648 = vmatpush1.msra.mxu0 0.0
        %649 = vmatprep.subr.mxu0 0.0
        %650 = vmatpush1.msra.mxu0 0.0
        %651 = vmatprep.mubr.f32.mxu0 0.0
        %v652 = vand.u32 %v331, 4294901760
        %v653 = vsub.f32 %v331, %v652
        %v654 = vand.u32 %v653, 4294901760
        %655 = vmatmul.mubr.f32.gmra.mrb[0].mxu0 %v654
        %v656 = vpop.f32.mrb[0].mxu0
        %v657 = vadd.f32 %v580, %v656
        %v658 = vpop.f32.mrb[0].mxu0
        %659 = vdwg.mxu0
        %660 = vmatprep.subr.mxu0 0.0
        %v661 = vand.u32 %v318, 4294901760
        %v662 = vsub.f32 %v318, %v661
        %v663 = vand.u32 %v662, 4294901760
        %664 = vmatpush1.msra.mxu0 %v663
        %665 = vmatprep.subr.mxu0 0.0
        %v666 = vand.u32 %v319, 4294901760
        %v667 = vsub.f32 %v319, %v666
        %v668 = vand.u32 %v667, 4294901760
        %669 = vmatpush1.msra.mxu0 %v668
        %670 = vmatprep.subr.mxu0 0.0
        %v671 = vand.u32 %v320, 4294901760
        %v672 = vsub.f32 %v320, %v671
        %v673 = vand.u32 %v672, 4294901760
        %674 = vmatpush1.msra.mxu0 %v673
        %675 = vmatprep.subr.mxu0 0.0
        %v676 = vand.u32 %v321, 4294901760
        %v677 = vsub.f32 %v321, %v676
        %v678 = vand.u32 %v677, 4294901760
        %679 = vmatpush1.msra.mxu0 %v678
        %680 = vmatprep.subr.mxu0 0.0
        %681 = vmatpush1.msra.mxu0 0.0
        %682 = vmatprep.subr.mxu0 0.0
        %683 = vmatpush1.msra.mxu0 0.0
        %684 = vmatprep.subr.mxu0 0.0
        %685 = vmatpush1.msra.mxu0 0.0
        %686 = vmatprep.subr.mxu0 0.0
        %687 = vmatpush1.msra.mxu0 0.0
        %688 = vmatprep.subr.mxu0 0.0
        %689 = vmatpush1.msra.mxu0 0.0
        %690 = vmatprep.subr.mxu0 0.0
        %691 = vmatpush1.msra.mxu0 0.0
        %692 = vmatprep.subr.mxu0 0.0
        %693 = vmatpush1.msra.mxu0 0.0
        %694 = vmatprep.subr.mxu0 0.0
        %695 = vmatpush1.msra.mxu0 0.0
        %696 = vmatprep.subr.mxu0 0.0
        %697 = vmatpush1.msra.mxu0 0.0
        %698 = vmatprep.subr.mxu0 0.0
        %699 = vmatpush1.msra.mxu0 0.0
        %700 = vmatprep.subr.mxu0 0.0
        %701 = vmatpush1.msra.mxu0 0.0
        %702 = vmatprep.subr.mxu0 0.0
        %703 = vmatpush1.msra.mxu0 0.0
        %704 = vmatprep.subr.mxu0 0.0
        %705 = vmatpush1.msra.mxu0 0.0
        %706 = vmatprep.subr.mxu0 0.0
        %707 = vmatpush1.msra.mxu0 0.0
        %708 = vmatprep.subr.mxu0 0.0
        %709 = vmatpush1.msra.mxu0 0.0
        %710 = vmatprep.subr.mxu0 0.0
        %711 = vmatpush1.msra.mxu0 0.0
        %712 = vmatprep.subr.mxu0 0.0
        %713 = vmatpush1.msra.mxu0 0.0
        %714 = vmatprep.subr.mxu0 0.0
        %715 = vmatpush1.msra.mxu0 0.0
        %716 = vmatprep.subr.mxu0 0.0
        %717 = vmatpush1.msra.mxu0 0.0
        %718 = vmatprep.subr.mxu0 0.0
        %719 = vmatpush1.msra.mxu0 0.0
        %720 = vmatprep.subr.mxu0 0.0
        %721 = vmatpush1.msra.mxu0 0.0
        %722 = vmatprep.subr.mxu0 0.0
        %723 = vmatpush1.msra.mxu0 0.0
        %724 = vmatprep.subr.mxu0 0.0
        %725 = vmatpush1.msra.mxu0 0.0
        %726 = vmatprep.subr.mxu0 0.0
        %727 = vmatpush1.msra.mxu0 0.0
        %728 = vmatprep.subr.mxu0 0.0
        %729 = vmatpush1.msra.mxu0 0.0
        %730 = vmatprep.subr.mxu0 0.0
        %731 = vmatpush1.msra.mxu0 0.0
        %732 = vmatprep.subr.mxu0 0.0
        %733 = vmatpush1.msra.mxu0 0.0
        %734 = vmatprep.subr.mxu0 0.0
        %735 = vmatpush1.msra.mxu0 0.0
        %736 = vmatprep.mubr.f32.mxu0 0.0
        %v737 = vand.u32 %v331, 4294901760
        %738 = vmatmul.mubr.f32.gmra.mrb[0].mxu0 %v737
        %v739 = vpop.f32.mrb[0].mxu0
        %v740 = vadd.f32 %v657, %v739
        %v741 = vpop.f32.mrb[0].mxu0
        %742 = vdwg.mxu0
        %743 = vmatprep.subr.mxu0 0.0
        %v744 = vand.u32 %v318, 4294901760
        %745 = vmatpush1.msra.mxu0 %v744
        %746 = vmatprep.subr.mxu0 0.0
        %v747 = vand.u32 %v319, 4294901760
        %748 = vmatpush1.msra.mxu0 %v747
        %749 = vmatprep.subr.mxu0 0.0
        %v750 = vand.u32 %v320, 4294901760
        %751 = vmatpush1.msra.mxu0 %v750
        %752 = vmatprep.subr.mxu0 0.0
        %v753 = vand.u32 %v321, 4294901760
        %754 = vmatpush1.msra.mxu0 %v753
        %755 = vmatprep.subr.mxu0 0.0
        %756 = vmatpush1.msra.mxu0 0.0
        %757 = vmatprep.subr.mxu0 0.0
        %758 = vmatpush1.msra.mxu0 0.0
        %759 = vmatprep.subr.mxu0 0.0
        %760 = vmatpush1.msra.mxu0 0.0
        %761 = vmatprep.subr.mxu0 0.0
        %762 = vmatpush1.msra.mxu0 0.0
        %763 = vmatprep.subr.mxu0 0.0
        %764 = vmatpush1.msra.mxu0 0.0
        %765 = vmatprep.subr.mxu0 0.0
        %766 = vmatpush1.msra.mxu0 0.0
        %767 = vmatprep.subr.mxu0 0.0
        %768 = vmatpush1.msra.mxu0 0.0
        %769 = vmatprep.subr.mxu0 0.0
        %770 = vmatpush1.msra.mxu0 0.0
        %771 = vmatprep.subr.mxu0 0.0
        %772 = vmatpush1.msra.mxu0 0.0
        %773 = vmatprep.subr.mxu0 0.0
        %774 = vmatpush1.msra.mxu0 0.0
        %775 = vmatprep.subr.mxu0 0.0
        %776 = vmatpush1.msra.mxu0 0.0
        %777 = vmatprep.subr.mxu0 0.0
        %778 = vmatpush1.msra.mxu0 0.0
        %779 = vmatprep.subr.mxu0 0.0
        %780 = vmatpush1.msra.mxu0 0.0
        %781 = vmatprep.subr.mxu0 0.0
        %782 = vmatpush1.msra.mxu0 0.0
        %783 = vmatprep.subr.mxu0 0.0
        %784 = vmatpush1.msra.mxu0 0.0
        %785 = vmatprep.subr.mxu0 0.0
        %786 = vmatpush1.msra.mxu0 0.0
        %787 = vmatprep.subr.mxu0 0.0
        %788 = vmatpush1.msra.mxu0 0.0
        %789 = vmatprep.subr.mxu0 0.0
        %790 = vmatpush1.msra.mxu0 0.0
        %791 = vmatprep.subr.mxu0 0.0
        %792 = vmatpush1.msra.mxu0 0.0
        %793 = vmatprep.subr.mxu0 0.0
        %794 = vmatpush1.msra.mxu0 0.0
        %795 = vmatprep.subr.mxu0 0.0
        %796 = vmatpush1.msra.mxu0 0.0
        %797 = vmatprep.subr.mxu0 0.0
        %798 = vmatpush1.msra.mxu0 0.0
        %799 = vmatprep.subr.mxu0 0.0
        %800 = vmatpush1.msra.mxu0 0.0
        %801 = vmatprep.subr.mxu0 0.0
        %802 = vmatpush1.msra.mxu0 0.0
        %803 = vmatprep.subr.mxu0 0.0
        %804 = vmatpush1.msra.mxu0 0.0
        %805 = vmatprep.subr.mxu0 0.0
        %806 = vmatpush1.msra.mxu0 0.0
        %807 = vmatprep.subr.mxu0 0.0
        %808 = vmatpush1.msra.mxu0 0.0
        %809 = vmatprep.subr.mxu0 0.0
        %810 = vmatpush1.msra.mxu0 0.0
        %811 = vmatprep.mubr.f32.mxu0 0.0
        %v812 = vand.u32 %v331, 4294901760
        %813 = vmatmul.mubr.f32.gmra.mrb[0].mxu0 %v812
        %v814 = vpop.f32.mrb[0].mxu0
        %v815 = vadd.f32 %v740, %v814
        %v816 = vpop.f32.mrb[0].mxu0
        %817 = vdwg.mxu0
        %818 = vmax.xlane.f32.xlu0 %v815
        %v819 = vpop.xlane.xlu0 %818
        %v820 = vsub.f32 %v815, %v819
        %v821 = vmul.f32 %v820, 1.442695
        %v822 = vpow.pop %v821
        %823 = vadd.xlane.f32.xlu0 %v822
        %v824 = vpop.xlane.xlu0 %823
        %v825 = vrcp.pop %v824
        %v826 = vmul.f32 %v822, %v825
        %v827 = vld [vmem:[%s312] sm:$0xff]
        %v828 = vld [vmem:[%s5] sm:$0x7]
        %830 = vset.pattern.permute.xlu0 0
        %831 = vperm.xlu0 %830, %v827
        %v832 = vpop.permute.xlu0 %831
        %v834 = vlaneseq
        %v835 = vshrl.u32 %v834, 7
        %v836 = vsub.s32 0, %v835
        %v837 = vrot.slane %v828, %v836
        %v838 = vmul.f32 %v832, %v837
        %839 = vset.pattern.permute.xlu0 1
        %840 = vperm.xlu0 %839, %v827
        %v841 = vpop.permute.xlu0 %840
        %v843 = vlaneseq
        %v844 = vshrl.u32 %v843, 7
        %v845 = vsub.s32 1, %v844
        %v846 = vrot.slane %v828, %v845
        %v847 = vmul.f32 %v841, %v846
        %v848 = vadd.f32 %v838, %v847
        %849 = vset.pattern.permute.xlu0 2
        %850 = vperm.xlu0 %849, %v827
        %v851 = vpop.permute.xlu0 %850
        %v853 = vlaneseq
        %v854 = vshrl.u32 %v853, 7
        %v855 = vsub.s32 2, %v854
        %v856 = vrot.slane %v828, %v855
        %v857 = vmul.f32 %v851, %v856
        %v858 = vadd.f32 %v848, %v857
        %v859 = vld [vmem:[%s4] sm:$0x1]
        %v860 = vmul.f32 %v858, 1.442695
        %v861 = vpow.pop %v860
        %v863 = vlaneseq
        %v864 = vshrl.u32 %v863, 7
        %v865 = vsub.s32 0, %v864
        %v866 = vrot.slane %v859, %v865
        %v868 = vmul.f32 %v866, %v861
        %869 = vst [vmem:[%s304] sm:$0xff] %v826
        %v870 = vmul.f32 %v826, %v868
        %871 = vadd.xlane.f32.xlu0 %v870
        %v872 = vpop.xlane.xlu0 %871
        %vm873 = vcmask 7168
        %874 = vst.msk [vmem:[%s316] sm:$0xff] %vm873, %v872
        %p875 = scmp.lt.s32.totalorder %s23, 1
        %s876 = scalar_select %p875, %s23, 1
        %s877 = smul.addr %s876, 8
        %s878 = scalar_lea.vmem %s6, %s877
        %s879 = sand.u32 %s193, 1
        %s880 = scalar_lea.sflag [#allocation4], %s879
        %s881 = sand.u32 %s193, 1
        %s882 = smul.addr %s881, 8
        %s883 = scalar_lea.vmem [#allocation5], %s882
        // Predicated region
        $region49: #{tpu_custom_call.1} parent=43 // pred_check
          %p884 = pneg %p177
        $region50: #{tpu_custom_call.1} parent=43 // pred_check_branch
          %886 = sbr.rel (%p884) target = $region52
        $region51: #{tpu_custom_call.1} parent=43 // pred_region
          _
        $region52: #{tpu_custom_call.1} parent=43 // pred_fallthru
          _
        // Predicated region
        $region53: #{tpu_custom_call.1} parent=43 // pred_check
          %p887 = pneg %p203
        $region54: #{tpu_custom_call.1} parent=43 // pred_check_branch
          %889 = sbr.rel (%p887) target = $region56
        $region55: #{tpu_custom_call.1} parent=43 // pred_region
          %s891 = ssub.s32 128, 128
          %892 = vsyncadd %s880, %s891
          %s893 = smul.addr %s23, 128
          %s894 = scalar_lea.hbm %s7, %s893
          %s896 = sshll.u32 %s883, 4
          %s897 = int_to_ptr.vmem [resolvable:$true] %s896
          %899 = dma.vmem_to_hbm [thread:$0]  %s897, 128, %s894, %s880
        $region56: #{tpu_custom_call.1} parent=43 // pred_fallthru
          _
      $region44: #{tpu_custom_call.1} parent=5 // pred_fallthru
        _
      %p900 = scmp.le.s32.totalorder 2, %s18
      // Predicated region
      $region57: #{tpu_custom_call.1} parent=5 // pred_check
        %p901 = pneg %p900
      $region58: #{tpu_custom_call.1} parent=5 // pred_check_branch
        %903 = sbr.rel (%p901) target = $region60
      $region59: #{tpu_custom_call.1} parent=5 // pred_region
        %s904 = ssub.s32 %s18, 2
        // Predicated region
        $region61: #{tpu_custom_call.1} parent=59 // pred_check
          %p905 = pneg %p183
        $region62: #{tpu_custom_call.1} parent=59 // pred_check_branch
          %907 = sbr.rel (%p905) target = $region64
        $region63: #{tpu_custom_call.1} parent=59 // pred_region
          %p908 = scmp.lt.s32.totalorder %s24, 1
          %s909 = scalar_select %p908, %s24, 1
          %s910 = smul.addr %s909, 8
          %s911 = scalar_lea.vmem %s6, %s910
        $region64: #{tpu_custom_call.1} parent=59 // pred_fallthru
          _
        // Predicated region
        $region65: #{tpu_custom_call.1} parent=59 // pred_check
          %p912 = pneg %p209
        $region66: #{tpu_custom_call.1} parent=59 // pred_check_branch
          %914 = sbr.rel (%p912) target = $region68
        $region67: #{tpu_custom_call.1} parent=59 // pred_region
          %s915 = sand.u32 %s194, 1
          %s916 = scalar_lea.sflag [#allocation4], %s915
          %s917 = sand.u32 %s194, 1
          %s918 = smul.addr %s917, 8
          %s919 = scalar_lea.vmem [#allocation5], %s918
          %920 = dma.done %s916, 128
        $region68: #{tpu_custom_call.1} parent=59 // pred_fallthru
          _
      $region60: #{tpu_custom_call.1} parent=5 // pred_fallthru
        _
    $region6: #{tpu_custom_call.1} parent=1 // loop_footer
      %s22 = sadd.s32 1, %s18
    $region7: #{tpu_custom_call.1} parent=1 // loop_footer_branch
      %17 = sbr.rel target = $region3
    $region8: #{tpu_custom_call.1} parent=1 // loop_exit
      _
    %921 = vsyncpa [#allocation3], 1
    %s922 = scalar_lea.sflag [#allocation3], 1
    %923 = vsyncpa %s922, 1
    %924 = vsyncpa [#allocation4], 1
    %s925 = scalar_lea.sflag [#allocation4], 1
    %926 = vsyncpa %s925, 1

// kernel: tpu_custom_call.1
$region0: #{tpu_custom_call.1}
  #allocation0 [shape = 'u32[]', space=smem, size = 0x4, offset = 0x4, fixed_abs, tag = 'smem constant byte address 0x4 - core index']
  #allocation1 [shape = 'u32[144,128]{1,0:T(1,128)}', space=vmem, size = 0x12000, scoped, tag = 'internal scratch']
  %s0 = inlined_call_operand.vmem [shape: f32[16,32], index: 0, kind: input, shape index: {}]
  %s1 = inlined_call_operand.vmem [shape: f32[16,3], index: 1, kind: input, shape index: {}]
  %s2 = inlined_call_operand.hbm [shape: f32[32,128], index: 2, kind: input, shape index: {}]
  %s3 = inlined_call_operand.vmem [shape: f32[1,128], index: 3, kind: input, shape index: {}]
  %s4 = inlined_call_operand.vmem [shape: f32[1,128], index: 4, kind: input, shape index: {}]
  %s5 = inlined_call_operand.vmem [shape: f32[3,128], index: 5, kind: input, shape index: {}]
  %s6 = inlined_call_operand.vmem [shape: f32[16,1], index: 6, kind: output, shape index: {0}]
  %s7 = inlined_call_operand.hbm [shape: f32[16,128], index: 7, kind: output, shape index: {1}]
  %8 = xla_tuple %s6, %s7
  %s9 = sld [smem:[#allocation0]]
  $region69: #{tpu_custom_call.1} parent=0
    _
  %s11 = ssub.s32 1, %s9
  %s12 = scalar_select 0, %s11, %s9
  $region1: #{tpu_custom_call.1} parent=0
    #allocation2 [shape = 'u8[16384]{0}', space=vmem, size = 0x4000, scoped, tag = 'input window, operand 2, single buffered']
    #allocation3 [shape = 's32[2]{0}', space=sflag, size = 0x8, scoped, tag = 'scoped memory for tpu_custom_call.1']
    #allocation4 [shape = 's32[2]{0}', space=sflag, size = 0x8, scoped, tag = 'scoped memory for tpu_custom_call.1']
    #allocation5 [shape = 'u8[8192]{0}', space=vmem, size = 0x2000, scoped, tag = 'output window, operand 1']
    %13 = vsyncpa [#allocation3], 0
    %14 = vsyncpa [#allocation4], 0
    %s15 = scalar_lea.sflag [#allocation4], 1
    %16 = vsyncpa %s15, 0
    loop: start=0, step=1, limit=4
    $region2: #{tpu_custom_call.1} parent=1 // loop_pre_header
      _
    $region3: #{tpu_custom_call.1} parent=1 // loop_header
      %s18 = sphi 0, %s22
      %p19 = scmp.ge.s32.totalorder %s18, 4
      %s28 = sphi 0, %s30
      %s31 = sphi 0, %s28
      %s32 = sphi 0, %s31
      %s48 = sphi 0, %s32
      %s54 = sphi 0, %s56
      %s57 = sphi 0, %s54
      %s58 = sphi 0, %s57
      %s74 = sphi 0, %s58
      %s78 = sphi 0, %s78
      %s80 = sphi 0, %s78
      %s81 = sphi 0, %s80
      %s95 = sphi 0, %s81
      %s99 = sphi 0, %s99
      %s101 = sphi 0, %s99
      %s102 = sphi 0, %s101
      %s116 = sphi 0, %s102
      %s120 = sphi 0, %s120
      %s122 = sphi 0, %s120
      %s123 = sphi 0, %s122
      %s137 = sphi 0, %s123
      %s141 = sphi 0, %s141
      %s143 = sphi 0, %s141
      %s144 = sphi 0, %s143
      %s158 = sphi 0, %s144
      %s164 = sphi 0, %s166
      %s167 = sphi 0, %s164
      %s168 = sphi 0, %s167
      %s184 = sphi 0, %s168
      %s190 = sphi 0, %s192
      %s193 = sphi 0, %s190
      %s194 = sphi 0, %s193
      %s210 = sphi 0, %s194
    $region4: #{tpu_custom_call.1} parent=1 // loop_header_branch
      %21 = sbr.rel (%p19) target = $region8
    $region5: #{tpu_custom_call.1} parent=1 // loop_body
      %s23 = ssub.s32 %s18, 1
      %s24 = ssub.s32 %s18, 2
      %s25 = sadd.s32 %s18, 1
      %s26 = ssub.s32 %s18, %s25
      %p27 = scmp.eq.s32.totalorder %s26, 0
      %s29 = sadd.s32 %s28, 1
      %s30 = scalar_select %p27, %s28, %s29
      %p33 = pneg %p27
      %p34 = scmp.eq.s32.totalorder %s18, 1
      %p35 = por %p33, %p34
      %p36 = scmp.ne.s32.totalorder %s28, %s31
      %p37 = scmp.eq.s32.totalorder %s18, 0
      %p38 = por %p36, %p37
      %p39 = scmp.ne.s32.totalorder %s28, %s31
      %p40 = scmp.eq.s32.totalorder %s23, 1
      %p41 = por %p39, %p40
      %p42 = scmp.ne.s32.totalorder %s31, %s32
      %p43 = scmp.eq.s32.totalorder %s23, 0
      %p44 = por %p42, %p43
      %p45 = scmp.ne.s32.totalorder %s31, %s32
      %p46 = scmp.eq.s32.totalorder %s24, 1
      %p47 = por %p45, %p46
      %p49 = scmp.ne.s32.totalorder %s32, %s48
      %p50 = scmp.eq.s32.totalorder %s24, 0
      %p51 = por %p49, %p50
      %s52 = ssub.s32 %s18, %s25
      %p53 = scmp.eq.s32.totalorder %s52, 0
      %s55 = sadd.s32 %s54, 1
      %s56 = scalar_select %p53, %s54, %s55
      %p59 = pneg %p53
      %p60 = scmp.eq.s32.totalorder %s18, 1
      %p61 = por %p59, %p60
      %p62 = scmp.ne.s32.totalorder %s54, %s57
      %p63 = scmp.eq.s32.totalorder %s18, 0
      %p64 = por %p62, %p63
      %p65 = scmp.ne.s32.totalorder %s54, %s57
      %p66 = scmp.eq.s32.totalorder %s23, 1
      %p67 = por %p65, %p66
      %p68 = scmp.ne.s32.totalorder %s57, %s58
      %p69 = scmp.eq.s32.totalorder %s23, 0
      %p70 = por %p68, %p69
      %p71 = scmp.ne.s32.totalorder %s57, %s58
      %p72 = scmp.eq.s32.totalorder %s24, 1
      %p73 = por %p71, %p72
      %p75 = scmp.ne.s32.totalorder %s58, %s74
      %p76 = scmp.eq.s32.totalorder %s24, 0
      %p77 = por %p75, %p76
      %s79 = sadd.s32 %s78, 1
      %p82 = scmp.eq.s32.totalorder %s18, 1
      %p83 = scmp.ne.s32.totalorder %s78, %s80
      %p84 = scmp.eq.s32.totalorder %s18, 0
      %p85 = por %p83, %p84
      %p86 = scmp.ne.s32.totalorder %s78, %s80
      %p87 = scmp.eq.s32.totalorder %s23, 1
      %p88 = por %p86, %p87
      %p89 = scmp.ne.s32.totalorder %s80, %s81
      %p90 = scmp.eq.s32.totalorder %s23, 0
      %p91 = por %p89, %p90
      %p92 = scmp.ne.s32.totalorder %s80, %s81
      %p93 = scmp.eq.s32.totalorder %s24, 1
      %p94 = por %p92, %p93
      %p96 = scmp.ne.s32.totalorder %s81, %s95
      %p97 = scmp.eq.s32.totalorder %s24, 0
      %p98 = por %p96, %p97
      %s100 = sadd.s32 %s99, 1
      %p103 = scmp.eq.s32.totalorder %s18, 1
      %p104 = scmp.ne.s32.totalorder %s99, %s101
      %p105 = scmp.eq.s32.totalorder %s18, 0
      %p106 = por %p104, %p105
      %p107 = scmp.ne.s32.totalorder %s99, %s101
      %p108 = scmp.eq.s32.totalorder %s23, 1
      %p109 = por %p107, %p108
      %p110 = scmp.ne.s32.totalorder %s101, %s102
      %p111 = scmp.eq.s32.totalorder %s23, 0
      %p112 = por %p110, %p111
      %p113 = scmp.ne.s32.totalorder %s101, %s102
      %p114 = scmp.eq.s32.totalorder %s24, 1
      %p115 = por %p113, %p114
      %p117 = scmp.ne.s32.totalorder %s102, %s116
      %p118 = scmp.eq.s32.totalorder %s24, 0
      %p119 = por %p117, %p118
      %s121 = sadd.s32 %s120, 1
      %p124 = scmp.eq.s32.totalorder %s18, 1
      %p125 = scmp.ne.s32.totalorder %s120, %s122
      %p126 = scmp.eq.s32.totalorder %s18, 0
      %p127 = por %p125, %p126
      %p128 = scmp.ne.s32.totalorder %s120, %s122
      %p129 = scmp.eq.s32.totalorder %s23, 1
      %p130 = por %p128, %p129
      %p131 = scmp.ne.s32.totalorder %s122, %s123
      %p132 = scmp.eq.s32.totalorder %s23, 0
      %p133 = por %p131, %p132
      %p134 = scmp.ne.s32.totalorder %s122, %s123
      %p135 = scmp.eq.s32.totalorder %s24, 1
      %p136 = por %p134, %p135
      %p138 = scmp.ne.s32.totalorder %s123, %s137
      %p139 = scmp.eq.s32.totalorder %s24, 0
      %p140 = por %p138, %p139
      %s142 = sadd.s32 %s141, 1
      %p145 = scmp.eq.s32.totalorder %s18, 1
      %p146 = scmp.ne.s32.totalorder %s141, %s143
      %p147 = scmp.eq.s32.totalorder %s18, 0
      %p148 = por %p146, %p147
      %p149 = scmp.ne.s32.totalorder %s141, %s143
      %p150 = scmp.eq.s32.totalorder %s23, 1
      %p151 = por %p149, %p150
      %p152 = scmp.ne.s32.totalorder %s143, %s144
      %p153 = scmp.eq.s32.totalorder %s23, 0
      %p154 = por %p152, %p153
      %p155 = scmp.ne.s32.totalorder %s143, %s144
      %p156 = scmp.eq.s32.totalorder %s24, 1
      %p157 = por %p155, %p156
      %p159 = scmp.ne.s32.totalorder %s144, %s158
      %p160 = scmp.eq.s32.totalorder %s24, 0
      %p161 = por %p159, %p160
      %s162 = ssub.s32 %s18, %s25
      %p163 = scmp.eq.s32.totalorder %s162, 0
      %s165 = sadd.s32 %s164, 1
      %s166 = scalar_select %p163, %s164, %s165
      %p169 = pneg %p163
      %p170 = scmp.eq.s32.totalorder %s18, 1
      %p171 = por %p169, %p170
      %p172 = scmp.ne.s32.totalorder %s164, %s167
      %p173 = scmp.eq.s32.totalorder %s18, 0
      %p174 = por %p172, %p173
      %p175 = scmp.ne.s32.totalorder %s164, %s167
      %p176 = scmp.eq.s32.totalorder %s23, 1
      %p177 = por %p175, %p176
      %p178 = scmp.ne.s32.totalorder %s167, %s168
      %p179 = scmp.eq.s32.totalorder %s23, 0
      %p180 = por %p178, %p179
      %p181 = scmp.ne.s32.totalorder %s167, %s168
      %p182 = scmp.eq.s32.totalorder %s24, 1
      %p183 = por %p181, %p182
      %p185 = scmp.ne.s32.totalorder %s168, %s184
      %p186 = scmp.eq.s32.totalorder %s24, 0
      %p187 = por %p185, %p186
      %s188 = ssub.s32 %s18, %s25
      %p189 = scmp.eq.s32.totalorder %s188, 0
      %s191 = sadd.s32 %s190, 1
      %s192 = scalar_select %p189, %s190, %s191
      %p195 = pneg %p189
      %p196 = scmp.eq.s32.totalorder %s18, 1
      %p197 = por %p195, %p196
      %p198 = scmp.ne.s32.totalorder %s190, %s193
      %p199 = scmp.eq.s32.totalorder %s18, 0
      %p200 = por %p198, %p199
      %p201 = scmp.ne.s32.totalorder %s190, %s193
      %p202 = scmp.eq.s32.totalorder %s23, 1
      %p203 = por %p201, %p202
      %p204 = scmp.ne.s32.totalorder %s193, %s194
      %p205 = scmp.eq.s32.totalorder %s23, 0
      %p206 = por %p204, %p205
      %p207 = scmp.ne.s32.totalorder %s193, %s194
      %p208 = scmp.eq.s32.totalorder %s24, 1
      %p209 = por %p207, %p208
      %p211 = scmp.ne.s32.totalorder %s194, %s210
      %p212 = scmp.eq.s32.totalorder %s24, 0
      %p213 = por %p211, %p212
      %p214 = scmp.le.s32.totalorder 1, %s18
      %p215 = scmp.lt.s32.totalorder %s18, 3
      %p216 = pnand %p214, %p215
      %p217 = pneg %p216
      // Predicated region
      $region9: #{tpu_custom_call.1} parent=5 // pred_check
        _
      $region10: #{tpu_custom_call.1} parent=5 // pred_check_branch
        %219 = sbr.rel (%p216) target = $region12
      $region11: #{tpu_custom_call.1} parent=5 // pred_region
        %s220 = ssub.s32 %s18, 1
        // Predicated region
        $region13: #{tpu_custom_call.1} parent=11 // pred_check
          %p221 = pneg %p91
        $region14: #{tpu_custom_call.1} parent=11 // pred_check_branch
          %223 = sbr.rel (%p221) target = $region16
        $region15: #{tpu_custom_call.1} parent=11 // pred_region
          %s225 = ssub.s32 512, 512
          %226 = vsyncadd [#allocation3], %s225
          %s227 = sshll.u32 [#allocation2], 4
          %s228 = int_to_ptr.vmem [resolvable:$true] %s227
          %233 = dma.hbm_to_vmem [thread:$0]  %s2, 512, %s228, [#allocation3], 128, 128, 8
        $region16: #{tpu_custom_call.1} parent=11 // pred_fallthru
          _
        // Predicated region
        $region17: #{tpu_custom_call.1} parent=11 // pred_check
          %p234 = pneg %p112
        $region18: #{tpu_custom_call.1} parent=11 // pred_check_branch
          %236 = sbr.rel (%p234) target = $region20
        $region19: #{tpu_custom_call.1} parent=11 // pred_region
          _
        $region20: #{tpu_custom_call.1} parent=11 // pred_fallthru
          _
        // Predicated region
        $region21: #{tpu_custom_call.1} parent=11 // pred_check
          %p237 = pneg %p133
        $region22: #{tpu_custom_call.1} parent=11 // pred_check_branch
          %239 = sbr.rel (%p237) target = $region24
        $region23: #{tpu_custom_call.1} parent=11 // pred_region
          _
        $region24: #{tpu_custom_call.1} parent=11 // pred_fallthru
          _
        // Predicated region
        $region25: #{tpu_custom_call.1} parent=11 // pred_check
          %p240 = pneg %p154
        $region26: #{tpu_custom_call.1} parent=11 // pred_check_branch
          %242 = sbr.rel (%p240) target = $region28
        $region27: #{tpu_custom_call.1} parent=11 // pred_region
          _
        $region28: #{tpu_custom_call.1} parent=11 // pred_fallthru
          _
      $region12: #{tpu_custom_call.1} parent=5 // pred_fallthru
        _
      %p243 = scmp.lt.s32.totalorder %s18, 2
      // Predicated region
      $region29: #{tpu_custom_call.1} parent=5 // pred_check
        %p244 = pneg %p243
      $region30: #{tpu_custom_call.1} parent=5 // pred_check_branch
        %246 = sbr.rel (%p244) target = $region32
      $region31: #{tpu_custom_call.1} parent=5 // pred_region
        // Predicated region
        $region33: #{tpu_custom_call.1} parent=31 // pred_check
          %p247 = pneg %p38
        $region34: #{tpu_custom_call.1} parent=31 // pred_check_branch
          %249 = sbr.rel (%p247) target = $region36
        $region35: #{tpu_custom_call.1} parent=31 // pred_region
          %p250 = scmp.lt.s32.totalorder %s18, 1
          %s251 = scalar_select %p250, %s18, 1
          %s252 = smul.addr %s251, 8
          %s253 = scalar_lea.vmem %s0, %s252
        $region36: #{tpu_custom_call.1} parent=31 // pred_fallthru
          _
        // Predicated region
        $region37: #{tpu_custom_call.1} parent=31 // pred_check
          %p254 = pneg %p64
        $region38: #{tpu_custom_call.1} parent=31 // pred_check_branch
          %256 = sbr.rel (%p254) target = $region40
        $region39: #{tpu_custom_call.1} parent=31 // pred_region
          %p257 = scmp.lt.s32.totalorder %s18, 1
          %s258 = scalar_select %p257, %s18, 1
          %s259 = smul.addr %s258, 8
          %s260 = scalar_lea.vmem %s1, %s259
        $region40: #{tpu_custom_call.1} parent=31 // pred_fallthru
          _
      $region32: #{tpu_custom_call.1} parent=5 // pred_fallthru
        _
      %p261 = scmp.le.s32.totalorder 1, %s18
      %p262 = scmp.lt.s32.totalorder %s18, 3
      %p263 = pnand %p261, %p262
      %p264 = pneg %p263
      // Predicated region
      $region41: #{tpu_custom_call.1} parent=5 // pred_check
        _
      $region42: #{tpu_custom_call.1} parent=5 // pred_check_branch
        %266 = sbr.rel (%p263) target = $region44
      $region43: #{tpu_custom_call.1} parent=5 // pred_region
        %s267 = ssub.s32 %s18, 1
        // Predicated region
        $region45: #{tpu_custom_call.1} parent=43 // pred_check
          %p268 = pneg %p91
        $region46: #{tpu_custom_call.1} parent=43 // pred_check_branch
          %270 = sbr.rel (%p268) target = $region48
        $region47: #{tpu_custom_call.1} parent=43 // pred_region
          %271 = dma.done [#allocation3], 512
        $region48: #{tpu_custom_call.1} parent=43 // pred_fallthru
          _
        %p272 = scmp.lt.s32.totalorder %s23, 1
        %s273 = scalar_select %p272, %s23, 1
        %s274 = smul.addr %s273, 8
        %s275 = scalar_lea.vmem %s0, %s274
        %p276 = pneg %p44
        %p277 = pneg %p41
        %p278 = scmp.lt.s32.totalorder %s23, 1
        %s279 = scalar_select %p278, %s23, 1
        %s280 = smul.addr %s279, 8
        %s281 = scalar_lea.vmem %s1, %s280
        %p282 = pneg %p70
        %p283 = pneg %p67
        %p284 = pneg %p91
        %p285 = pneg %p88
        %p286 = pneg %p112
        %p287 = pneg %p109
        %p288 = pneg %p133
        %p289 = pneg %p130
        %p290 = pneg %p154
        %p291 = pneg %p151
        %p292 = pneg %p180
        %p293 = pneg %p177
        %p294 = scmp.lt.s32.totalorder %s23, 1
        %s295 = scalar_select %p294, %s23, 1
        %s296 = smul.addr %s295, 8
        %s297 = scalar_lea.vmem %s6, %s296
        %p298 = pneg %p206
        %p299 = pneg %p203
        %s300 = sand.u32 %s193, 1
        %s301 = scalar_lea.sflag [#allocation4], %s300
        %s302 = sand.u32 %s193, 1
        %s303 = smul.addr %s302, 8
        %s304 = scalar_lea.vmem [#allocation5], %s303
        %p305 = scmp.lt.s32.totalorder %s23, 1
        %s306 = scalar_select %p305, %s23, 1
        %s307 = smul.addr %s306, 8
        %s308 = scalar_lea.vmem %s0, %s307
        %p309 = scmp.lt.s32.totalorder %s23, 1
        %s310 = scalar_select %p309, %s23, 1
        %s311 = smul.addr %s310, 8
        %s312 = scalar_lea.vmem %s1, %s311
        %p313 = scmp.lt.s32.totalorder %s23, 1
        %s314 = scalar_select %p313, %s23, 1
        %s315 = smul.addr %s314, 8
        %s316 = scalar_lea.vmem %s6, %s315
        %v317 = vld [vmem:[%s308] sm:$0xff]
        %v318 = vld [vmem:[#allocation2] sm:$0xff]
        %v319 = vld [vmem:[#allocation2 + $0x8] sm:$0xff]
        %v320 = vld [vmem:[#allocation2 + $0x10] sm:$0xff]
        %v321 = vld [vmem:[#allocation2 + $0x18] sm:$0xff]
        %v322 = vld [vmem:[%s3] sm:$0x1]
        %v324 = vlaneseq
        %v325 = vshrl.u32 %v324, 7
        %v326 = vsub.s32 0, %v325
        %v327 = vrot.slane %v322, %v326
        %vm329 = vcmask 261120
        %v331 = vsel %vm329, %v317, 0
        %333 = vmatprep.subr.mxu0 0.0
        %v334 = vand.u32 %v318, 4294901760
        %335 = vmatpush1.msra.mxu0 %v334
        %336 = vmatprep.subr.mxu0 0.0
        %v337 = vand.u32 %v319, 4294901760
        %338 = vmatpush1.msra.mxu0 %v337
        %339 = vmatprep.subr.mxu0 0.0
        %v340 = vand.u32 %v320, 4294901760
        %341 = vmatpush1.msra.mxu0 %v340
        %342 = vmatprep.subr.mxu0 0.0
        %v343 = vand.u32 %v321, 4294901760
        %344 = vmatpush1.msra.mxu0 %v343
        %345 = vmatprep.subr.mxu0 0.0
        %346 = vmatpush1.msra.mxu0 0.0
        %347 = vmatprep.subr.mxu0 0.0
        %348 = vmatpush1.msra.mxu0 0.0
        %349 = vmatprep.subr.mxu0 0.0
        %350 = vmatpush1.msra.mxu0 0.0
        %351 = vmatprep.subr.mxu0 0.0
        %352 = vmatpush1.msra.mxu0 0.0
        %353 = vmatprep.subr.mxu0 0.0
        %354 = vmatpush1.msra.mxu0 0.0
        %355 = vmatprep.subr.mxu0 0.0
        %356 = vmatpush1.msra.mxu0 0.0
        %357 = vmatprep.subr.mxu0 0.0
        %358 = vmatpush1.msra.mxu0 0.0
        %359 = vmatprep.subr.mxu0 0.0
        %360 = vmatpush1.msra.mxu0 0.0
        %361 = vmatprep.subr.mxu0 0.0
        %362 = vmatpush1.msra.mxu0 0.0
        %363 = vmatprep.subr.mxu0 0.0
        %364 = vmatpush1.msra.mxu0 0.0
        %365 = vmatprep.subr.mxu0 0.0
        %366 = vmatpush1.msra.mxu0 0.0
        %367 = vmatprep.subr.mxu0 0.0
        %368 = vmatpush1.msra.mxu0 0.0
        %369 = vmatprep.subr.mxu0 0.0
        %370 = vmatpush1.msra.mxu0 0.0
        %371 = vmatprep.subr.mxu0 0.0
        %372 = vmatpush1.msra.mxu0 0.0
        %373 = vmatprep.subr.mxu0 0.0
        %374 = vmatpush1.msra.mxu0 0.0
        %375 = vmatprep.subr.mxu0 0.0
        %376 = vmatpush1.msra.mxu0 0.0
        %377 = vmatprep.subr.mxu0 0.0
        %378 = vmatpush1.msra.mxu0 0.0
        %379 = vmatprep.subr.mxu0 0.0
        %380 = vmatpush1.msra.mxu0 0.0
        %381 = vmatprep.subr.mxu0 0.0
        %382 = vmatpush1.msra.mxu0 0.0
        %383 = vmatprep.subr.mxu0 0.0
        %384 = vmatpush1.msra.mxu0 0.0
        %385 = vmatprep.subr.mxu0 0.0
        %386 = vmatpush1.msra.mxu0 0.0
        %387 = vmatprep.subr.mxu0 0.0
        %388 = vmatpush1.msra.mxu0 0.0
        %389 = vmatprep.subr.mxu0 0.0
        %390 = vmatpush1.msra.mxu0 0.0
        %391 = vmatprep.subr.mxu0 0.0
        %392 = vmatpush1.msra.mxu0 0.0
        %393 = vmatprep.subr.mxu0 0.0
        %394 = vmatpush1.msra.mxu0 0.0
        %395 = vmatprep.subr.mxu0 0.0
        %396 = vmatpush1.msra.mxu0 0.0
        %397 = vmatprep.subr.mxu0 0.0
        %398 = vmatpush1.msra.mxu0 0.0
        %399 = vmatprep.subr.mxu0 0.0
        %400 = vmatpush1.msra.mxu0 0.0
        %401 = vmatprep.mubr.f32.mxu0 0.0
        %v402 = vand.u32 %v331, 4294901760
        %v403 = vsub.f32 %v331, %v402
        %v404 = vand.u32 %v403, 4294901760
        %v405 = vsub.f32 %v403, %v404
        %v406 = vand.u32 %v405, 4294901760
        %407 = vmatmul.mubr.f32.gmra.mrb[0].mxu0 %v406
        %v408 = vpop.f32.mrb[0].mxu0
        %v409 = vadd.f32 %v327, %v408
        %v410 = vpop.f32.mrb[0].mxu0
        %411 = vdwg.mxu0
        %412 = vmatprep.subr.mxu0 0.0
        %v413 = vand.u32 %v318, 4294901760
        %v414 = vsub.f32 %v318, %v413
        %v415 = vand.u32 %v414, 4294901760
        %v416 = vsub.f32 %v414, %v415
        %v417 = vand.u32 %v416, 4294901760
        %418 = vmatpush1.msra.mxu0 %v417
        %419 = vmatprep.subr.mxu0 0.0
        %v420 = vand.u32 %v319, 4294901760
        %v421 = vsub.f32 %v319, %v420
        %v422 = vand.u32 %v421, 4294901760
        %v423 = vsub.f32 %v421, %v422
        %v424 = vand.u32 %v423, 4294901760
        %425 = vmatpush1.msra.mxu0 %v424
        %426 = vmatprep.subr.mxu0 0.0
        %v427 = vand.u32 %v320, 4294901760
        %v428 = vsub.f32 %v320, %v427
        %v429 = vand.u32 %v428, 4294901760
        %v430 = vsub.f32 %v428, %v429
        %v431 = vand.u32 %v430, 4294901760
        %432 = vmatpush1.msra.mxu0 %v431
        %433 = vmatprep.subr.mxu0 0.0
        %v434 = vand.u32 %v321, 4294901760
        %v435 = vsub.f32 %v321, %v434
        %v436 = vand.u32 %v435, 4294901760
        %v437 = vsub.f32 %v435, %v436
        %v438 = vand.u32 %v437, 4294901760
        %439 = vmatpush1.msra.mxu0 %v438
        %440 = vmatprep.subr.mxu0 0.0
        %441 = vmatpush1.msra.mxu0 0.0
        %442 = vmatprep.subr.mxu0 0.0
        %443 = vmatpush1.msra.mxu0 0.0
        %444 = vmatprep.subr.mxu0 0.0
        %445 = vmatpush1.msra.mxu0 0.0
        %446 = vmatprep.subr.mxu0 0.0
        %447 = vmatpush1.msra.mxu0 0.0
        %448 = vmatprep.subr.mxu0 0.0
        %449 = vmatpush1.msra.mxu0 0.0
        %450 = vmatprep.subr.mxu0 0.0
        %451 = vmatpush1.msra.mxu0 0.0
        %452 = vmatprep.subr.mxu0 0.0
        %453 = vmatpush1.msra.mxu0 0.0
        %454 = vmatprep.subr.mxu0 0.0
        %455 = vmatpush1.msra.mxu0 0.0
        %456 = vmatprep.subr.mxu0 0.0
        %457 = vmatpush1.msra.mxu0 0.0
        %458 = vmatprep.subr.mxu0 0.0
        %459 = vmatpush1.msra.mxu0 0.0
        %460 = vmatprep.subr.mxu0 0.0
        %461 = vmatpush1.msra.mxu0 0.0
        %462 = vmatprep.subr.mxu0 0.0
        %463 = vmatpush1.msra.mxu0 0.0
        %464 = vmatprep.subr.mxu0 0.0
        %465 = vmatpush1.msra.mxu0 0.0
        %466 = vmatprep.subr.mxu0 0.0
        %467 = vmatpush1.msra.mxu0 0.0
        %468 = vmatprep.subr.mxu0 0.0
        %469 = vmatpush1.msra.mxu0 0.0
        %470 = vmatprep.subr.mxu0 0.0
        %471 = vmatpush1.msra.mxu0 0.0
        %472 = vmatprep.subr.mxu0 0.0
        %473 = vmatpush1.msra.mxu0 0.0
        %474 = vmatprep.subr.mxu0 0.0
        %475 = vmatpush1.msra.mxu0 0.0
        %476 = vmatprep.subr.mxu0 0.0
        %477 = vmatpush1.msra.mxu0 0.0
        %478 = vmatprep.subr.mxu0 0.0
        %479 = vmatpush1.msra.mxu0 0.0
        %480 = vmatprep.subr.mxu0 0.0
        %481 = vmatpush1.msra.mxu0 0.0
        %482 = vmatprep.subr.mxu0 0.0
        %483 = vmatpush1.msra.mxu0 0.0
        %484 = vmatprep.subr.mxu0 0.0
        %485 = vmatpush1.msra.mxu0 0.0
        %486 = vmatprep.subr.mxu0 0.0
        %487 = vmatpush1.msra.mxu0 0.0
        %488 = vmatprep.subr.mxu0 0.0
        %489 = vmatpush1.msra.mxu0 0.0
        %490 = vmatprep.subr.mxu0 0.0
        %491 = vmatpush1.msra.mxu0 0.0
        %492 = vmatprep.subr.mxu0 0.0
        %493 = vmatpush1.msra.mxu0 0.0
        %494 = vmatprep.subr.mxu0 0.0
        %495 = vmatpush1.msra.mxu0 0.0
        %496 = vmatprep.mubr.f32.mxu0 0.0
        %v497 = vand.u32 %v331, 4294901760
        %498 = vmatmul.mubr.f32.gmra.mrb[0].mxu0 %v497
        %v499 = vpop.f32.mrb[0].mxu0
        %v500 = vadd.f32 %v409, %v499
        %v501 = vpop.f32.mrb[0].mxu0
        %502 = vdwg.mxu0
        %503 = vmatprep.subr.mxu0 0.0
        %v504 = vand.u32 %v318, 4294901760
        %v505 = vsub.f32 %v318, %v504
        %506 = vmatpush1.msra.mxu0 %v505
        %507 = vmatprep.subr.mxu0 0.0
        %v508 = vand.u32 %v319, 4294901760
        %v509 = vsub.f32 %v319, %v508
        %510 = vmatpush1.msra.mxu0 %v509
        %511 = vmatprep.subr.mxu0 0.0
        %v512 = vand.u32 %v320, 4294901760
        %v513 = vsub.f32 %v320, %v512
        %514 = vmatpush1.msra.mxu0 %v513
        %515 = vmatprep.subr.mxu0 0.0
        %v516 = vand.u32 %v321, 4294901760
        %v517 = vsub.f32 %v321, %v516
        %518 = vmatpush1.msra.mxu0 %v517
        %519 = vmatprep.subr.mxu0 0.0
        %520 = vmatpush1.msra.mxu0 0.0
        %521 = vmatprep.subr.mxu0 0.0
        %522 = vmatpush1.msra.mxu0 0.0
        %523 = vmatprep.subr.mxu0 0.0
        %524 = vmatpush1.msra.mxu0 0.0
        %525 = vmatprep.subr.mxu0 0.0
        %526 = vmatpush1.msra.mxu0 0.0
        %527 = vmatprep.subr.mxu0 0.0
        %528 = vmatpush1.msra.mxu0 0.0
        %529 = vmatprep.subr.mxu0 0.0
        %530 = vmatpush1.msra.mxu0 0.0
        %531 = vmatprep.subr.mxu0 0.0
        %532 = vmatpush1.msra.mxu0 0.0
        %533 = vmatprep.subr.mxu0 0.0
        %534 = vmatpush1.msra.mxu0 0.0
        %535 = vmatprep.subr.mxu0 0.0
        %536 = vmatpush1.msra.mxu0 0.0
        %537 = vmatprep.subr.mxu0 0.0
        %538 = vmatpush1.msra.mxu0 0.0
        %539 = vmatprep.subr.mxu0 0.0
        %540 = vmatpush1.msra.mxu0 0.0
        %541 = vmatprep.subr.mxu0 0.0
        %542 = vmatpush1.msra.mxu0 0.0
        %543 = vmatprep.subr.mxu0 0.0
        %544 = vmatpush1.msra.mxu0 0.0
        %545 = vmatprep.subr.mxu0 0.0
        %546 = vmatpush1.msra.mxu0 0.0
        %547 = vmatprep.subr.mxu0 0.0
        %548 = vmatpush1.msra.mxu0 0.0
        %549 = vmatprep.subr.mxu0 0.0
        %550 = vmatpush1.msra.mxu0 0.0
        %551 = vmatprep.subr.mxu0 0.0
        %552 = vmatpush1.msra.mxu0 0.0
        %553 = vmatprep.subr.mxu0 0.0
        %554 = vmatpush1.msra.mxu0 0.0
        %555 = vmatprep.subr.mxu0 0.0
        %556 = vmatpush1.msra.mxu0 0.0
        %557 = vmatprep.subr.mxu0 0.0
        %558 = vmatpush1.msra.mxu0 0.0
        %559 = vmatprep.subr.mxu0 0.0
        %560 = vmatpush1.msra.mxu0 0.0
        %561 = vmatprep.subr.mxu0 0.0
        %562 = vmatpush1.msra.mxu0 0.0
        %563 = vmatprep.subr.mxu0 0.0
        %564 = vmatpush1.msra.mxu0 0.0
        %565 = vmatprep.subr.mxu0 0.0
        %566 = vmatpush1.msra.mxu0 0.0
        %567 = vmatprep.subr.mxu0 0.0
        %568 = vmatpush1.msra.mxu0 0.0
        %569 = vmatprep.subr.mxu0 0.0
        %570 = vmatpush1.msra.mxu0 0.0
        %571 = vmatprep.subr.mxu0 0.0
        %572 = vmatpush1.msra.mxu0 0.0
        %573 = vmatprep.subr.mxu0 0.0
        %574 = vmatpush1.msra.mxu0 0.0
        %575 = vmatprep.mubr.f32.mxu0 0.0
        %v576 = vand.u32 %v331, 4294901760
        %v577 = vsub.f32 %v331, %v576
        %578 = vmatmul.mubr.f32.gmra.mrb[0].mxu0 %v577
        %v579 = vpop.f32.mrb[0].mxu0
        %v580 = vadd.f32 %v500, %v579
        %v581 = vpop.f32.mrb[0].mxu0
        %582 = vdwg.mxu0
        %583 = vmatprep.subr.mxu0 0.0
        %v584 = vand.u32 %v318, 4294901760
        %585 = vmatpush1.msra.mxu0 %v584
        %586 = vmatprep.subr.mxu0 0.0
        %v587 = vand.u32 %v319, 4294901760
        %588 = vmatpush1.msra.mxu0 %v587
        %589 = vmatprep.subr.mxu0 0.0
        %v590 = vand.u32 %v320, 4294901760
        %591 = vmatpush1.msra.mxu0 %v590
        %592 = vmatprep.subr.mxu0 0.0
        %v593 = vand.u32 %v321, 4294901760
        %594 = vmatpush1.msra.mxu0 %v593
        %595 = vmatprep.subr.mxu0 0.0
        %596 = vmatpush1.msra.mxu0 0.0
        %597 = vmatprep.subr.mxu0 0.0
        %598 = vmatpush1.msra.mxu0 0.0
        %599 = vmatprep.subr.mxu0 0.0
        %600 = vmatpush1.msra.mxu0 0.0
        %601 = vmatprep.subr.mxu0 0.0
        %602 = vmatpush1.msra.mxu0 0.0
        %603 = vmatprep.subr.mxu0 0.0
        %604 = vmatpush1.msra.mxu0 0.0
        %605 = vmatprep.subr.mxu0 0.0
        %606 = vmatpush1.msra.mxu0 0.0
        %607 = vmatprep.subr.mxu0 0.0
        %608 = vmatpush1.msra.mxu0 0.0
        %609 = vmatprep.subr.mxu0 0.0
        %610 = vmatpush1.msra.mxu0 0.0
        %611 = vmatprep.subr.mxu0 0.0
        %612 = vmatpush1.msra.mxu0 0.0
        %613 = vmatprep.subr.mxu0 0.0
        %614 = vmatpush1.msra.mxu0 0.0
        %615 = vmatprep.subr.mxu0 0.0
        %616 = vmatpush1.msra.mxu0 0.0
        %617 = vmatprep.subr.mxu0 0.0
        %618 = vmatpush1.msra.mxu0 0.0
        %619 = vmatprep.subr.mxu0 0.0
        %620 = vmatpush1.msra.mxu0 0.0
        %621 = vmatprep.subr.mxu0 0.0
        %622 = vmatpush1.msra.mxu0 0.0
        %623 = vmatprep.subr.mxu0 0.0
        %624 = vmatpush1.msra.mxu0 0.0
        %625 = vmatprep.subr.mxu0 0.0
        %626 = vmatpush1.msra.mxu0 0.0
        %627 = vmatprep.subr.mxu0 0.0
        %628 = vmatpush1.msra.mxu0 0.0
        %629 = vmatprep.subr.mxu0 0.0
        %630 = vmatpush1.msra.mxu0 0.0
        %631 = vmatprep.subr.mxu0 0.0
        %632 = vmatpush1.msra.mxu0 0.0
        %633 = vmatprep.subr.mxu0 0.0
        %634 = vmatpush1.msra.mxu0 0.0
        %635 = vmatprep.subr.mxu0 0.0
        %636 = vmatpush1.msra.mxu0 0.0
        %637 = vmatprep.subr.mxu0 0.0
        %638 = vmatpush1.msra.mxu0 0.0
        %639 = vmatprep.subr.mxu0 0.0
        %640 = vmatpush1.msra.mxu0 0.0
        %641 = vmatprep.subr.mxu0 0.0
        %642 = vmatpush1.msra.mxu0 0.0
        %643 = vmatprep.subr.mxu0 0.0
        %644 = vmatpush1.msra.mxu0 0.0
        %645 = vmatprep.subr.mxu0 0.0
        %646 = vmatpush1.msra.mxu0 0.0
        %647 = vmatprep.subr.mxu0 0.0
        %648 = vmatpush1.msra.mxu0 0.0
        %649 = vmatprep.subr.mxu0 0.0
        %650 = vmatpush1.msra.mxu0 0.0
        %651 = vmatprep.mubr.f32.mxu0 0.0
        %v652 = vand.u32 %v331, 4294901760
        %v653 = vsub.f32 %v331, %v652
        %v654 = vand.u32 %v653, 4294901760
        %655 = vmatmul.mubr.f32.gmra.mrb[0].mxu0 %v654
        %v656 = vpop.f32.mrb[0].mxu0
        %v657 = vadd.f32 %v580, %v656
        %v658 = vpop.f32.mrb[0].mxu0
        %659 = vdwg.mxu0
        %660 = vmatprep.subr.mxu0 0.0
        %v661 = vand.u32 %v318, 4294901760
        %v662 = vsub.f32 %v318, %v661
        %v663 = vand.u32 %v662, 4294901760
        %664 = vmatpush1.msra.mxu0 %v663
        %665 = vmatprep.subr.mxu0 0.0
        %v666 = vand.u32 %v319, 4294901760
        %v667 = vsub.f32 %v319, %v666
        %v668 = vand.u32 %v667, 4294901760
        %669 = vmatpush1.msra.mxu0 %v668
        %670 = vmatprep.subr.mxu0 0.0
        %v671 = vand.u32 %v320, 4294901760
        %v672 = vsub.f32 %v320, %v671
        %v673 = vand.u32 %v672, 4294901760
        %674 = vmatpush1.msra.mxu0 %v673
        %675 = vmatprep.subr.mxu0 0.0
        %v676 = vand.u32 %v321, 4294901760
        %v677 = vsub.f32 %v321, %v676
        %v678 = vand.u32 %v677, 4294901760
        %679 = vmatpush1.msra.mxu0 %v678
        %680 = vmatprep.subr.mxu0 0.0
        %681 = vmatpush1.msra.mxu0 0.0
        %682 = vmatprep.subr.mxu0 0.0
        %683 = vmatpush1.msra.mxu0 0.0
        %684 = vmatprep.subr.mxu0 0.0
        %685 = vmatpush1.msra.mxu0 0.0
        %686 = vmatprep.subr.mxu0 0.0
        %687 = vmatpush1.msra.mxu0 0.0
        %688 = vmatprep.subr.mxu0 0.0
        %689 = vmatpush1.msra.mxu0 0.0
        %690 = vmatprep.subr.mxu0 0.0
        %691 = vmatpush1.msra.mxu0 0.0
        %692 = vmatprep.subr.mxu0 0.0
        %693 = vmatpush1.msra.mxu0 0.0
        %694 = vmatprep.subr.mxu0 0.0
        %695 = vmatpush1.msra.mxu0 0.0
        %696 = vmatprep.subr.mxu0 0.0
        %697 = vmatpush1.msra.mxu0 0.0
        %698 = vmatprep.subr.mxu0 0.0
        %699 = vmatpush1.msra.mxu0 0.0
        %700 = vmatprep.subr.mxu0 0.0
        %701 = vmatpush1.msra.mxu0 0.0
        %702 = vmatprep.subr.mxu0 0.0
        %703 = vmatpush1.msra.mxu0 0.0
        %704 = vmatprep.subr.mxu0 0.0
        %705 = vmatpush1.msra.mxu0 0.0
        %706 = vmatprep.subr.mxu0 0.0
        %707 = vmatpush1.msra.mxu0 0.0
        %708 = vmatprep.subr.mxu0 0.0
        %709 = vmatpush1.msra.mxu0 0.0
        %710 = vmatprep.subr.mxu0 0.0
        %711 = vmatpush1.msra.mxu0 0.0
        %712 = vmatprep.subr.mxu0 0.0
        %713 = vmatpush1.msra.mxu0 0.0
        %714 = vmatprep.subr.mxu0 0.0
        %715 = vmatpush1.msra.mxu0 0.0
        %716 = vmatprep.subr.mxu0 0.0
        %717 = vmatpush1.msra.mxu0 0.0
        %718 = vmatprep.subr.mxu0 0.0
        %719 = vmatpush1.msra.mxu0 0.0
        %720 = vmatprep.subr.mxu0 0.0
        %721 = vmatpush1.msra.mxu0 0.0
        %722 = vmatprep.subr.mxu0 0.0
        %723 = vmatpush1.msra.mxu0 0.0
        %724 = vmatprep.subr.mxu0 0.0
        %725 = vmatpush1.msra.mxu0 0.0
        %726 = vmatprep.subr.mxu0 0.0
        %727 = vmatpush1.msra.mxu0 0.0
        %728 = vmatprep.subr.mxu0 0.0
        %729 = vmatpush1.msra.mxu0 0.0
        %730 = vmatprep.subr.mxu0 0.0
        %731 = vmatpush1.msra.mxu0 0.0
        %732 = vmatprep.subr.mxu0 0.0
        %733 = vmatpush1.msra.mxu0 0.0
        %734 = vmatprep.subr.mxu0 0.0
        %735 = vmatpush1.msra.mxu0 0.0
        %736 = vmatprep.mubr.f32.mxu0 0.0
        %v737 = vand.u32 %v331, 4294901760
        %738 = vmatmul.mubr.f32.gmra.mrb[0].mxu0 %v737
        %v739 = vpop.f32.mrb[0].mxu0
        %v740 = vadd.f32 %v657, %v739
        %v741 = vpop.f32.mrb[0].mxu0
        %742 = vdwg.mxu0
        %743 = vmatprep.subr.mxu0 0.0
        %v744 = vand.u32 %v318, 4294901760
        %745 = vmatpush1.msra.mxu0 %v744
        %746 = vmatprep.subr.mxu0 0.0
        %v747 = vand.u32 %v319, 4294901760
        %748 = vmatpush1.msra.mxu0 %v747
        %749 = vmatprep.subr.mxu0 0.0
        %v750 = vand.u32 %v320, 4294901760
        %751 = vmatpush1.msra.mxu0 %v750
        %752 = vmatprep.subr.mxu0 0.0
        %v753 = vand.u32 %v321, 4294901760
        %754 = vmatpush1.msra.mxu0 %v753
        %755 = vmatprep.subr.mxu0 0.0
        %756 = vmatpush1.msra.mxu0 0.0
        %757 = vmatprep.subr.mxu0 0.0
        %758 = vmatpush1.msra.mxu0 0.0
        %759 = vmatprep.subr.mxu0 0.0
        %760 = vmatpush1.msra.mxu0 0.0
        %761 = vmatprep.subr.mxu0 0.0
        %762 = vmatpush1.msra.mxu0 0.0
        %763 = vmatprep.subr.mxu0 0.0
        %764 = vmatpush1.msra.mxu0 0.0
        %765 = vmatprep.subr.mxu0 0.0
        %766 = vmatpush1.msra.mxu0 0.0
        %767 = vmatprep.subr.mxu0 0.0
        %768 = vmatpush1.msra.mxu0 0.0
        %769 = vmatprep.subr.mxu0 0.0
        %770 = vmatpush1.msra.mxu0 0.0
        %771 = vmatprep.subr.mxu0 0.0
        %772 = vmatpush1.msra.mxu0 0.0
        %773 = vmatprep.subr.mxu0 0.0
        %774 = vmatpush1.msra.mxu0 0.0
        %775 = vmatprep.subr.mxu0 0.0
        %776 = vmatpush1.msra.mxu0 0.0
        %777 = vmatprep.subr.mxu0 0.0
        %778 = vmatpush1.msra.mxu0 0.0
        %779 = vmatprep.subr.mxu0 0.0
        %780 = vmatpush1.msra.mxu0 0.0
        %781 = vmatprep.subr.mxu0 0.0
        %782 = vmatpush1.msra.mxu0 0.0
        %783 = vmatprep.subr.mxu0 0.0
        %784 = vmatpush1.msra.mxu0 0.0
        %785 = vmatprep.subr.mxu0 0.0
        %786 = vmatpush1.msra.mxu0 0.0
        %787 = vmatprep.subr.mxu0 0.0
        %788 = vmatpush1.msra.mxu0 0.0
        %789 = vmatprep.subr.mxu0 0.0
        %790 = vmatpush1.msra.mxu0 0.0
        %791 = vmatprep.subr.mxu0 0.0
        %792 = vmatpush1.msra.mxu0 0.0
        %793 = vmatprep.subr.mxu0 0.0
        %794 = vmatpush1.msra.mxu0 0.0
        %795 = vmatprep.subr.mxu0 0.0
        %796 = vmatpush1.msra.mxu0 0.0
        %797 = vmatprep.subr.mxu0 0.0
        %798 = vmatpush1.msra.mxu0 0.0
        %799 = vmatprep.subr.mxu0 0.0
        %800 = vmatpush1.msra.mxu0 0.0
        %801 = vmatprep.subr.mxu0 0.0
        %802 = vmatpush1.msra.mxu0 0.0
        %803 = vmatprep.subr.mxu0 0.0
        %804 = vmatpush1.msra.mxu0 0.0
        %805 = vmatprep.subr.mxu0 0.0
        %806 = vmatpush1.msra.mxu0 0.0
        %807 = vmatprep.subr.mxu0 0.0
        %808 = vmatpush1.msra.mxu0 0.0
        %809 = vmatprep.subr.mxu0 0.0
        %810 = vmatpush1.msra.mxu0 0.0
        %811 = vmatprep.mubr.f32.mxu0 0.0
        %v812 = vand.u32 %v331, 4294901760
        %813 = vmatmul.mubr.f32.gmra.mrb[0].mxu0 %v812
        %v814 = vpop.f32.mrb[0].mxu0
        %v815 = vadd.f32 %v740, %v814
        %v816 = vpop.f32.mrb[0].mxu0
        %817 = vdwg.mxu0
        %818 = vmax.xlane.f32.xlu0 %v815
        %v819 = vpop.xlane.xlu0 %818
        %v820 = vsub.f32 %v815, %v819
        %v821 = vmul.f32 %v820, 1.442695
        %v822 = vpow.pop %v821
        %823 = vadd.xlane.f32.xlu0 %v822
        %v824 = vpop.xlane.xlu0 %823
        %v825 = vrcp.pop %v824
        %v826 = vmul.f32 %v822, %v825
        %v827 = vld [vmem:[%s312] sm:$0xff]
        %v828 = vld [vmem:[%s5] sm:$0x7]
        %830 = vset.pattern.permute.xlu0 0
        %831 = vperm.xlu0 %830, %v827
        %v832 = vpop.permute.xlu0 %831
        %v834 = vlaneseq
        %v835 = vshrl.u32 %v834, 7
        %v836 = vsub.s32 0, %v835
        %v837 = vrot.slane %v828, %v836
        %v838 = vmul.f32 %v832, %v837
        %839 = vset.pattern.permute.xlu0 1
        %840 = vperm.xlu0 %839, %v827
        %v841 = vpop.permute.xlu0 %840
        %v843 = vlaneseq
        %v844 = vshrl.u32 %v843, 7
        %v845 = vsub.s32 1, %v844
        %v846 = vrot.slane %v828, %v845
        %v847 = vmul.f32 %v841, %v846
        %v848 = vadd.f32 %v838, %v847
        %849 = vset.pattern.permute.xlu0 2
        %850 = vperm.xlu0 %849, %v827
        %v851 = vpop.permute.xlu0 %850
        %v853 = vlaneseq
        %v854 = vshrl.u32 %v853, 7
        %v855 = vsub.s32 2, %v854
        %v856 = vrot.slane %v828, %v855
        %v857 = vmul.f32 %v851, %v856
        %v858 = vadd.f32 %v848, %v857
        %v859 = vld [vmem:[%s4] sm:$0x1]
        %v860 = vmul.f32 %v858, 1.442695
        %v861 = vpow.pop %v860
        %v863 = vlaneseq
        %v864 = vshrl.u32 %v863, 7
        %v865 = vsub.s32 0, %v864
        %v866 = vrot.slane %v859, %v865
        %v868 = vmul.f32 %v866, %v861
        %869 = vst [vmem:[%s304] sm:$0xff] %v826
        %v870 = vmul.f32 %v826, %v868
        %871 = vadd.xlane.f32.xlu0 %v870
        %v872 = vpop.xlane.xlu0 %871
        %vm873 = vcmask 7168
        %874 = vst.msk [vmem:[%s316] sm:$0xff] %vm873, %v872
        %p875 = scmp.lt.s32.totalorder %s23, 1
        %s876 = scalar_select %p875, %s23, 1
        %s877 = smul.addr %s876, 8
        %s878 = scalar_lea.vmem %s6, %s877
        %s879 = sand.u32 %s193, 1
        %s880 = scalar_lea.sflag [#allocation4], %s879
        %s881 = sand.u32 %s193, 1
        %s882 = smul.addr %s881, 8
        %s883 = scalar_lea.vmem [#allocation5], %s882
        // Predicated region
        $region49: #{tpu_custom_call.1} parent=43 // pred_check
          %p884 = pneg %p177
        $region50: #{tpu_custom_call.1} parent=43 // pred_check_branch
          %886 = sbr.rel (%p884) target = $region52
        $region51: #{tpu_custom_call.1} parent=43 // pred_region
          _
        $region52: #{tpu_custom_call.1} parent=43 // pred_fallthru
          _
        // Predicated region
        $region53: #{tpu_custom_call.1} parent=43 // pred_check
          %p887 = pneg %p203
        $region54: #{tpu_custom_call.1} parent=43 // pred_check_branch
          %889 = sbr.rel (%p887) target = $region56
        $region55: #{tpu_custom_call.1} parent=43 // pred_region
          %s891 = ssub.s32 128, 128
          %892 = vsyncadd %s880, %s891
          %s893 = smul.addr %s23, 128
          %s894 = scalar_lea.hbm %s7, %s893
          %s896 = sshll.u32 %s883, 4
          %s897 = int_to_ptr.vmem [resolvable:$true] %s896
          %899 = dma.vmem_to_hbm [thread:$0]  %s897, 128, %s894, %s880
        $region56: #{tpu_custom_call.1} parent=43 // pred_fallthru
          _
      $region44: #{tpu_custom_call.1} parent=5 // pred_fallthru
        _
      %p900 = scmp.le.s32.totalorder 2, %s18
      // Predicated region
      $region57: #{tpu_custom_call.1} parent=5 // pred_check
        %p901 = pneg %p900
      $region58: #{tpu_custom_call.1} parent=5 // pred_check_branch
        %903 = sbr.rel (%p901) target = $region60
      $region59: #{tpu_custom_call.1} parent=5 // pred_region
        %s904 = ssub.s32 %s18, 2
        // Predicated region
        $region61: #{tpu_custom_call.1} parent=59 // pred_check
          %p905 = pneg %p183
        $region62: #{tpu_custom_call.1} parent=59 // pred_check_branch
          %907 = sbr.rel (%p905) target = $region64
        $region63: #{tpu_custom_call.1} parent=59 // pred_region
          %p908 = scmp.lt.s32.totalorder %s24, 1
          %s909 = scalar_select %p908, %s24, 1
          %s910 = smul.addr %s909, 8
          %s911 = scalar_lea.vmem %s6, %s910
        $region64: #{tpu_custom_call.1} parent=59 // pred_fallthru
          _
        // Predicated region
        $region65: #{tpu_custom_call.1} parent=59 // pred_check
          %p912 = pneg %p209
        $region66: #{tpu_custom_call.1} parent=59 // pred_check_branch
          %914 = sbr.rel (%p912) target = $region68
        $region67: #{tpu_custom_call.1} parent=59 // pred_region
          %s915 = sand.u32 %s194, 1
          %s916 = scalar_lea.sflag [#allocation4], %s915
          %s917 = sand.u32 %s194, 1
          %s918 = smul.addr %s917, 8
          %s919 = scalar_lea.vmem [#allocation5], %s918
          %920 = dma.done %s916, 128
        $region68: #{tpu_custom_call.1} parent=59 // pred_fallthru
          _
      $region60: #{tpu_custom_call.1} parent=5 // pred_fallthru
        _
    $region6: #{tpu_custom_call.1} parent=1 // loop_footer
      %s22 = sadd.s32 1, %s18
    $region7: #{tpu_custom_call.1} parent=1 // loop_footer_branch
      %17 = sbr.rel target = $region3
    $region8: #{tpu_custom_call.1} parent=1 // loop_exit
      _
    %921 = vsyncpa [#allocation3], 1
    %s922 = scalar_lea.sflag [#allocation3], 1
    %923 = vsyncpa %s922, 1
    %924 = vsyncpa [#allocation4], 1
    %s925 = scalar_lea.sflag [#allocation4], 1
    %926 = vsyncpa %s925, 1

</llo_original>
